<compile_context>
chip_gen: v7x
topology: tpu7x:2x2x1
jax: 0.10.0
libtpu: 0.0.40
codegen_flags: <defaults>
</compile_context>

<pallas_src>
import functools

import jax
import jax.numpy as jnp
from jax.experimental import pallas as pl
from jax.experimental.pallas import tpu as pltpu


def _round_up(v, m):
    return ((v + m - 1) // m) * m


# --------------------------------------------------------------------------
# Kernel: one (batch, L-tile) block.
# --------------------------------------------------------------------------
def _residual_block_kernel(L, TL, pad, ragged,
                           x_ref, halo_ref, s_ref, t_ref,
                           w1_ref, b1_ref, w2_ref, b2_ref, o_ref):
    l = pl.program_id(1)

    x = x_ref[0]                                   # (TL, Cp) raw input (residual path)
    Cp = x.shape[1]

    # ---- BatchNorm1d affine on the main tile (stats folded in the wrapper) ----
    xb = x.astype(jnp.float32) * s_ref[...] + t_ref[...]

    # ---- zero the wrapper's L-padding rows (only exists when L % TL != 0;
    #      halos and all other edge cases are pre-masked in the wrapper) ----
    if ragged:
        row = l * TL + jax.lax.broadcasted_iota(jnp.int32, (TL, 1), 0)
        xb = jnp.where(row < L, xb, 0.0)

    # ---- assemble halo'd slab: rows [l*TL - pad, l*TL + TL + pad), already
    #      BN'd (halos come pre-BN'd + pre-masked from the wrapper) ----
    if pad > 0:
        h = halo_ref[...].reshape(2 * pad, Cp)     # [left pad rows ; right pad rows]
        slab = jnp.concatenate([h[:pad], xb, h[pad:]], axis=0)   # (TL + 2*pad, Cp)
    else:
        slab = xb

    # ---- Conv1d(C -> 2C, k, 'same') as ONE fused im2col matmul ----
    # TODO(synk): replace the shifted-slice im2col build with pltpu.roll or a
    # manual overlapped-window DMA (biggest remaining vld/vst cost on v5e).
    k = 2 * pad + 1
    xcol = jnp.concatenate([slab[t0:t0 + TL] for t0 in range(k)], axis=1)  # (TL, k*Cp)
    xcol = xcol.astype(w1_ref.dtype)               # bf16 operands, f32 accumulation

    y = jnp.dot(xcol, w1_ref[...], preferred_element_type=jnp.float32) + b1_ref[...]
    a = y[:, :Cp]                                  # free lane slice (Cp % 128 == 0)
    b = y[:, Cp:]

    # ---- GLU(dim=-2): a * sigmoid(b); divide goes through the EUP ----
    g = a * pl.reciprocal(1.0 + jnp.exp(-b), approx=True)       # (TL, Cp) f32

    # ---- Conv1d(C -> C, 1): pointwise matmul ----
    h2 = jnp.dot(g.astype(w2_ref.dtype), w2_ref[...],
                 preferred_element_type=jnp.float32) + b2_ref[...]

    # ---- residual ----
    o_ref[0] = (x.astype(jnp.float32) + h2).astype(o_ref.dtype)


# --------------------------------------------------------------------------
# Channels-last (NLC) entry point — preferred inside an encoder stack.
# --------------------------------------------------------------------------
def residual_block_nlc(x_nlc, params, *, tl=512, matmul_dtype=jnp.bfloat16,
                       eps=1e-5, vmem_limit_bytes=48 * 1024 * 1024):
    """x_nlc: (N, L, C). Returns (N, L, C).

    Note: tl=512 is a multiple of the 256-row MXU granule (v6e/v7x); on
    v5e/v6e with very large C you may raise vmem_limit_bytes to 64-96 MiB and
    tl to 1024; keep vmem_limit_bytes <= ~48 MiB on v7x (64 MiB physical).
    """
    N, L, C = x_nlc.shape
    gamma = params["gamma"].reshape(C)
    beta = params["beta"].reshape(C)
    w1 = params["w1"]                              # (k, C, 2C)
    b1 = params["b1"].reshape(2 * C)
    w2 = params["w2"]                              # (C, C)
    b2 = params["b2"].reshape(C)
    k = w1.shape[0]
    pad = (k - 1) // 2
    pad_h = max(pad, 1)

    # ---- lane-dense channel padding (padded channels stay exactly zero) ----
    Cp = _round_up(C, 128)

    # ---- BatchNorm1d training-mode batch stats: global over (N, L), so they
    #      are a cheap XLA reduction on the ORIGINAL tensor, folded into a
    #      per-channel affine applied in-kernel. ----
    # TODO(synk): running_mean/running_var buffers are not updated (pure fwd).
    xf = x_nlc.astype(jnp.float32)
    mean = jnp.mean(xf, axis=(0, 1))                                 # (C,)
    var = jnp.mean(jnp.square(xf - mean), axis=(0, 1))               # biased
    s = gamma * jax.lax.rsqrt(var + eps)
    t_shift = beta - mean * s
    s_row = jnp.pad(s, (0, Cp - C)).reshape(1, Cp).astype(jnp.float32)
    t_row = jnp.pad(t_shift, (0, Cp - C)).reshape(1, Cp).astype(jnp.float32)

    # ---- weights: fused im2col layout (k*Cp, 2*Cp), GLU halves in the two
    #      lane-aligned column blocks; bf16 matmul operands, f32 biases ----
    w1a = jnp.pad(w1[:, :, :C], ((0, 0), (0, Cp - C), (0, Cp - C)))
    w1b = jnp.pad(w1[:, :, C:], ((0, 0), (0, Cp - C), (0, Cp - C)))
    w1f = jnp.concatenate([w1a, w1b], axis=-1).reshape(k * Cp, 2 * Cp).astype(matmul_dtype)
    b1f = jnp.concatenate([jnp.pad(b1[:C], (0, Cp - C)),
                           jnp.pad(b1[C:], (0, Cp - C))]).reshape(1, 2 * Cp).astype(jnp.float32)
    w2f = jnp.pad(w2, ((0, Cp - C), (0, Cp - C))).astype(matmul_dtype)
    b2f = jnp.pad(b2, (0, Cp - C)).reshape(1, Cp).astype(jnp.float32)

    # ---- L tiling (sublane-aligned, last tile ragged-padded) ----
    TL = _round_up(min(tl, L), 8)
    nl = pl.cdiv(L, TL)
    L_pad = nl * TL
    ragged = (L % TL) != 0
    assert pad <= TL, "kernel_size too large for the chosen L tile"
    xp = jnp.pad(x_nlc, ((0, 0), (0, L_pad - L), (0, Cp - C)))

    # ---- merged per-block halos (N, nl, 2*pad_h, Cp): neighbours' edge rows,
    #      pre-BatchNorm'ed and zeroed outside [0, L) -> no in-kernel masking
    #      of halos and a single tiny DMA per grid step ----
    if pad > 0:
        x4 = xp.reshape(N, nl, TL, Cp)
        tail = x4[:, :, TL - pad:, :].astype(jnp.float32) * s_row + t_row  # (N,nl,pad,Cp)
        head = x4[:, :, :pad, :].astype(jnp.float32) * s_row + t_row
        base = (jnp.arange(nl) * TL)[:, None]
        tail_idx = base + (TL - pad) + jnp.arange(pad)[None, :]
        head_idx = base + jnp.arange(pad)[None, :]
        tail = jnp.where((tail_idx < L)[None, :, :, None], tail, 0.0)
        head = jnp.where((head_idx < L)[None, :, :, None], head, 0.0)
        zeros = jnp.zeros((N, 1, pad, Cp), jnp.float32)
        lhalo = jnp.concatenate([zeros, tail[:, :-1]], axis=1)   # rows l*TL-pad .. l*TL-1
        rhalo = jnp.concatenate([head[:, 1:], zeros], axis=1)    # rows (l+1)*TL .. +pad-1
        halos = jnp.concatenate([lhalo, rhalo], axis=2)          # (N, nl, 2*pad, Cp)
    else:
        halos = jnp.zeros((N, nl, 2 * pad_h, Cp), jnp.float32)

    kernel = functools.partial(_residual_block_kernel, L, TL, pad, ragged)

    def _call(single_buffer_consts):
        def const_spec(shape):
            idx = lambda n, l: (0,) * len(shape)
            if single_buffer_consts:
                # grid-invariant operands: single-buffer them (VMEM headroom)
                return pl.BlockSpec(shape, idx, pipeline_mode=pl.Buffered(1))
            return pl.BlockSpec(shape, idx)

        return pl.pallas_call(
            kernel,
            out_shape=jax.ShapeDtypeStruct((N, L_pad, Cp), x_nlc.dtype),
            grid=(N, nl),
            in_specs=[
                pl.BlockSpec((1, TL, Cp), lambda n, l: (n, l, 0)),            # x block
                pl.BlockSpec((1, 1, 2 * pad_h, Cp), lambda n, l: (n, l, 0, 0)),  # halos
                const_spec((1, Cp)),               # BN scale
                const_spec((1, Cp)),               # BN shift
                const_spec((k * Cp, 2 * Cp)),      # fused conv1 weight
                const_spec((1, 2 * Cp)),           # fused conv1 bias
                const_spec((Cp, Cp)),              # conv2 weight
                const_spec((1, Cp)),               # conv2 bias
            ],
            out_specs=pl.BlockSpec((1, TL, Cp), lambda n, l: (n, l, 0)),
            compiler_params=pltpu.CompilerParams(
                dimension_semantics=("parallel", "parallel"),
                vmem_limit_bytes=vmem_limit_bytes,
            ),
        )(xp, halos, s_row, t_row, w1f, b1f, w2f, b2f)

    try:
        out = _call(True)
    except Exception:
        # pipeline_mode=pl.Buffered(1) unsupported on this jax version:
        # fall back to default (double) buffering — correctness unaffected.
        out = _call(False)

    return out[:, :L, :C]


# --------------------------------------------------------------------------
# PyTorch-convention (NCL) wrapper.
# --------------------------------------------------------------------------
def residual_block(x_ncl, params, **kw):
    """x_ncl: (N, C, L).  Returns (N, C, L)."""
    # TODO(synk): keep the whole encoder stack in NLC end-to-end so these two
    # full-tensor HBM transpose passes disappear; they exist only to match the
    # PyTorch NCL API.
    x_nlc = jnp.transpose(x_ncl, (0, 2, 1))
    out_nlc = residual_block_nlc(x_nlc, params, **kw)
    return jnp.transpose(out_nlc, (0, 2, 1))


# --------------------------------------------------------------------------
# Parameters (channels-last layout) and a pure-JAX reference.
# --------------------------------------------------------------------------
def init_params(dim, kernel_size, key):
    """PyTorch shapes, pre-transposed for channels-last:
       w1: (k, dim, 2*dim)  where  w1[t, ci, co] = torch_w1[co, ci, t]
       w2: (dim, dim)       where  w2[ci, co]    = torch_w2[co, ci, 0]
    """
    k1, k2, k3, k4 = jax.random.split(key, 4)
    return {
        "gamma": jnp.ones((1, dim), jnp.float32),
        "beta": jnp.zeros((1, dim), jnp.float32),
        "w1": 0.1 * jax.random.normal(k1, (kernel_size, dim, 2 * dim), jnp.float32),
        "b1": 0.1 * jax.random.normal(k2, (1, 2 * dim), jnp.float32),
        "w2": 0.1 * jax.random.normal(k3, (dim, dim), jnp.float32),
        "b2": 0.1 * jax.random.normal(k4, (1, dim), jnp.float32),
    }


def _reference(x_ncl, params, eps=1e-5):
    """Pure-jnp NCL reference matching the PyTorch module (training-mode BN)."""
    gamma = params["gamma"].reshape(-1)
    beta = params["beta"].reshape(-1)
    w1 = params["w1"]
    b1 = params["b1"].reshape(-1)
    w2 = params["w2"]
    b2 = params["b2"].reshape(-1)
    N, C, L = x_ncl.shape
    k = w1.shape[0]
    pad = (k - 1) // 2
    x = x_ncl.astype(jnp.float32)
    mean = jnp.mean(x, axis=(0, 2), keepdims=True)
    var = jnp.mean((x - mean) ** 2, axis=(0, 2), keepdims=True)
    xb = (x - mean) * jax.lax.rsqrt(var + eps) * gamma[None, :, None] + beta[None, :, None]
    xpad = jnp.pad(xb, ((0, 0), (0, 0), (pad, pad)))
    y = jnp.zeros((N, 2 * C, L), jnp.float32)
    for t in range(k):
        y = y + jnp.einsum("ncl,cd->ndl", xpad[:, :, t:t + L], w1[t])
    y = y + b1[None, :, None]
    a, b = y[:, :C, :], y[:, C:, :]
    g = a * jax.nn.sigmoid(b)
    h = jnp.einsum("ncl,cd->ndl", g, w2) + b2[None, :, None]
    return x_ncl + h


if __name__ == "__main__":
    # NOTE: the module asserts kernel_size is odd (its default 2 would raise),
    # so we use kernel_size=3.
    kernel_size = 3
    key = jax.random.PRNGKey(0)
    kx, kp, kx2 = jax.random.split(key, 3)

    # case 1: toy shape, single L tile
    N, C, L = 2, 4, 16
    x = jax.random.normal(kx, (N, C, L), jnp.float32)
    params = init_params(C, kernel_size, kp)
    out = residual_block(x, params)
    jax.block_until_ready(out)
    assert out.shape == (N, C, L), out.shape
    ref = _reference(x, params)
    err = float(jnp.max(jnp.abs(out - ref)))
    assert err < 5e-2, f"max abs error {err}"

    # case 2: multiple L tiles (exercises halos, edge masking, ragged L pad)
    L2 = 40
    x2 = jax.random.normal(kx2, (N, C, L2), jnp.float32)
    out2 = residual_block(x2, params, tl=16)
    jax.block_until_ready(out2)
    assert out2.shape == (N, C, L2), out2.shape
    ref2 = _reference(x2, params)
    err2 = float(jnp.max(jnp.abs(out2 - ref2)))
    assert err2 < 5e-2, f"max abs error {err2}"

    print("KERNEL_OK")
</pallas_src>

<mosaic_0001>
module attributes {stable_mosaic.version = 11 : i64} {
  func.func @_residual_block_kernel(%arg0: i32, %arg1: i32, %arg2: memref<1x16x128xf32, #tpu.memory_space<vmem>>, %arg3: memref<1x1x2x128xf32, #tpu.memory_space<vmem>>, %arg4: memref<1x128xf32, #tpu.memory_space<vmem>>, %arg5: memref<1x128xf32, #tpu.memory_space<vmem>>, %arg6: memref<384x256xbf16, #tpu.memory_space<vmem>>, %arg7: memref<1x256xf32, #tpu.memory_space<vmem>>, %arg8: memref<128x128xbf16, #tpu.memory_space<vmem>>, %arg9: memref<1x128xf32, #tpu.memory_space<vmem>>, %arg10: memref<1x16x128xf32, #tpu.memory_space<vmem>>) attributes {dimension_semantics = [#tpu.dimension_semantics<parallel>, #tpu.dimension_semantics<parallel>], iteration_bounds = array<i64: 2, 1>, scalar_prefetch = 0 : i64, scratch_operands = 0 : i64, tpu.core_type = #tpu.core_type<tc>, window_params = [{transform_indices = @transform_0, window_bounds = array<i64: 1, 16, 128>}, {transform_indices = @transform_1, window_bounds = array<i64: 1, 1, 2, 128>}, {pipeline_mode = #tpu.pipeline_mode<synchronous>, transform_indices = @transform_2, window_bounds = array<i64: 1, 128>}, {pipeline_mode = #tpu.pipeline_mode<synchronous>, transform_indices = @transform_3, window_bounds = array<i64: 1, 128>}, {pipeline_mode = #tpu.pipeline_mode<synchronous>, transform_indices = @transform_4, window_bounds = array<i64: 384, 256>}, {pipeline_mode = #tpu.pipeline_mode<synchronous>, transform_indices = @transform_5, window_bounds = array<i64: 1, 256>}, {pipeline_mode = #tpu.pipeline_mode<synchronous>, transform_indices = @transform_6, window_bounds = array<i64: 128, 128>}, {pipeline_mode = #tpu.pipeline_mode<synchronous>, transform_indices = @transform_7, window_bounds = array<i64: 1, 128>}, {transform_indices = @transform_8, window_bounds = array<i64: 1, 16, 128>}]} {
    %c0 = arith.constant 0 : index
    %c0_0 = arith.constant 0 : index
    %c0_1 = arith.constant 0 : index
    %0 = vector.load %arg2[%c0, %c0_0, %c0_1] : memref<1x16x128xf32, #tpu.memory_space<vmem>>, vector<1x16x128xf32>
    %1 = vector.shape_cast %0 : vector<1x16x128xf32> to vector<16x128xf32>
    %c0_2 = arith.constant 0 : index
    %c0_3 = arith.constant 0 : index
    %2 = vector.load %arg4[%c0_2, %c0_3] : memref<1x128xf32, #tpu.memory_space<vmem>>, vector<1x128xf32>
    %3 = vector.broadcast %2 : vector<1x128xf32> to vector<16x128xf32>
    %4 = arith.mulf %1, %3 : vector<16x128xf32>
    %c0_4 = arith.constant 0 : index
    %c0_5 = arith.constant 0 : index
    %5 = vector.load %arg5[%c0_4, %c0_5] : memref<1x128xf32, #tpu.memory_space<vmem>>, vector<1x128xf32>
    %6 = vector.broadcast %5 : vector<1x128xf32> to vector<16x128xf32>
    %7 = arith.addf %4, %6 : vector<16x128xf32>
    %c0_6 = arith.constant 0 : index
    %c0_7 = arith.constant 0 : index
    %c0_8 = arith.constant 0 : index
    %c0_9 = arith.constant 0 : index
    %8 = vector.load %arg3[%c0_6, %c0_7, %c0_8, %c0_9] : memref<1x1x2x128xf32, #tpu.memory_space<vmem>>, vector<1x1x2x128xf32>
    %9 = vector.shape_cast %8 : vector<1x1x2x128xf32> to vector<2x128xf32>
    %10 = vector.extract_strided_slice %9 {offsets = [0, 0], sizes = [1, 128], strides = [1, 1]} : vector<2x128xf32> to vector<1x128xf32>
    %11 = vector.extract_strided_slice %9 {offsets = [1, 0], sizes = [1, 128], strides = [1, 1]} : vector<2x128xf32> to vector<1x128xf32>
    %12 = tpu.concatenate %10, %7, %11 in 0 : vector<1x128xf32>, vector<16x128xf32>, vector<1x128xf32> -> vector<18x128xf32>
    %13 = vector.extract_strided_slice %12 {offsets = [0, 0], sizes = [16, 128], strides = [1, 1]} : vector<18x128xf32> to vector<16x128xf32>
    %14 = vector.extract_strided_slice %12 {offsets = [1, 0], sizes = [16, 128], strides = [1, 1]} : vector<18x128xf32> to vector<16x128xf32>
    %15 = vector.extract_strided_slice %12 {offsets = [2, 0], sizes = [16, 128], strides = [1, 1]} : vector<18x128xf32> to vector<16x128xf32>
    %16 = tpu.concatenate %13, %14, %15 in 1 : vector<16x128xf32>, vector<16x128xf32>, vector<16x128xf32> -> vector<16x384xf32>
    %17 = arith.truncf %16 : vector<16x384xf32> to vector<16x384xbf16>
    %c0_10 = arith.constant 0 : index
    %c0_11 = arith.constant 0 : index
    %18 = vector.load %arg6[%c0_10, %c0_11] : memref<384x256xbf16, #tpu.memory_space<vmem>>, vector<384x256xbf16>
    %cst = arith.constant dense<0.000000e+00> : vector<16x256xf32>
    %19 = tpu.matmul %17, %18, %cst {dimension_numbers = #tpu.dot_dimension_numbers<[1], [0], [0], [1], [0, 0, 1, 1], [], []>} : vector<16x384xbf16>, vector<384x256xbf16>, vector<16x256xf32> -> vector<16x256xf32>
    %c0_12 = arith.constant 0 : index
    %c0_13 = arith.constant 0 : index
    %20 = vector.load %arg7[%c0_12, %c0_13] : memref<1x256xf32, #tpu.memory_space<vmem>>, vector<1x256xf32>
    %21 = vector.broadcast %20 : vector<1x256xf32> to vector<16x256xf32>
    %22 = arith.addf %19, %21 : vector<16x256xf32>
    %23 = vector.extract_strided_slice %22 {offsets = [0, 0], sizes = [16, 128], strides = [1, 1]} : vector<16x256xf32> to vector<16x128xf32>
    %24 = vector.extract_strided_slice %22 {offsets = [0, 128], sizes = [16, 128], strides = [1, 1]} : vector<16x256xf32> to vector<16x128xf32>
    %cst_14 = arith.constant 0.000000e+00 : f32
    %25 = vector.broadcast %cst_14 : f32 to vector<16x128xf32>
    %26 = arith.subf %25, %24 : vector<16x128xf32>
    %27 = math.exp %26 : vector<16x128xf32>
    %cst_15 = arith.constant 1.000000e+00 : f32
    %28 = vector.broadcast %cst_15 : f32 to vector<16x128xf32>
    %29 = arith.addf %28, %27 : vector<16x128xf32>
    %30 = tpu.reciprocal %29 {approx = true} : vector<16x128xf32> -> vector<16x128xf32>
    %31 = arith.mulf %23, %30 : vector<16x128xf32>
    %32 = arith.truncf %31 : vector<16x128xf32> to vector<16x128xbf16>
    %c0_16 = arith.constant 0 : index
    %c0_17 = arith.constant 0 : index
    %33 = vector.load %arg8[%c0_16, %c0_17] : memref<128x128xbf16, #tpu.memory_space<vmem>>, vector<128x128xbf16>
    %cst_18 = arith.constant dense<0.000000e+00> : vector<16x128xf32>
    %34 = tpu.matmul %32, %33, %cst_18 {dimension_numbers = #tpu.dot_dimension_numbers<[1], [0], [0], [1], [0, 0, 1, 1], [], []>} : vector<16x128xbf16>, vector<128x128xbf16>, vector<16x128xf32> -> vector<16x128xf32>
    %c0_19 = arith.constant 0 : index
    %c0_20 = arith.constant 0 : index
    %35 = vector.load %arg9[%c0_19, %c0_20] : memref<1x128xf32, #tpu.memory_space<vmem>>, vector<1x128xf32>
    %36 = vector.broadcast %35 : vector<1x128xf32> to vector<16x128xf32>
    %37 = arith.addf %34, %36 : vector<16x128xf32>
    %38 = arith.addf %1, %37 : vector<16x128xf32>
    %c0_21 = arith.constant 0 : index
    %c0_22 = arith.constant 0 : index
    %c0_23 = arith.constant 0 : index
    %39 = vector.load %arg10[%c0_21, %c0_22, %c0_23] : memref<1x16x128xf32, #tpu.memory_space<vmem>>, vector<1x16x128xf32>
    %40 = vector.shape_cast %39 : vector<1x16x128xf32> to vector<16x128xf32>
    %41 = vector.shape_cast %38 : vector<16x128xf32> to vector<1x16x128xf32>
    tpu.vector_store %arg10[%c0_21, %c0_22, %c0_23], %41 {strides = array<i32>} : memref<1x16x128xf32, #tpu.memory_space<vmem>>, vector<1x16x128xf32>,
    return
  }
  func.func @transform_0(%arg0: i32, %arg1: i32) -> (i32, i32, i32) {
    %c0_i32 = arith.constant 0 : i32
    %c0_i32_0 = arith.constant 0 : i32
    return %arg0, %arg1, %c0_i32 : i32, i32, i32
  }
  func.func @transform_1(%arg0: i32, %arg1: i32) -> (i32, i32, i32, i32) {
    %c0_i32 = arith.constant 0 : i32
    %c0_i32_0 = arith.constant 0 : i32
    %c0_i32_1 = arith.constant 0 : i32
    return %arg0, %arg1, %c0_i32, %c0_i32_0 : i32, i32, i32, i32
  }
  func.func @transform_2(%arg0: i32, %arg1: i32) -> (i32, i32) {
    %c0_i32 = arith.constant 0 : i32
    %c0_i32_0 = arith.constant 0 : i32
    %c0_i32_1 = arith.constant 0 : i32
    return %c0_i32, %c0_i32_0 : i32, i32
  }
  func.func @transform_3(%arg0: i32, %arg1: i32) -> (i32, i32) {
    %c0_i32 = arith.constant 0 : i32
    %c0_i32_0 = arith.constant 0 : i32
    %c0_i32_1 = arith.constant 0 : i32
    return %c0_i32, %c0_i32_0 : i32, i32
  }
  func.func @transform_4(%arg0: i32, %arg1: i32) -> (i32, i32) {
    %c0_i32 = arith.constant 0 : i32
    %c0_i32_0 = arith.constant 0 : i32
    %c0_i32_1 = arith.constant 0 : i32
    return %c0_i32, %c0_i32_0 : i32, i32
  }
  func.func @transform_5(%arg0: i32, %arg1: i32) -> (i32, i32) {
    %c0_i32 = arith.constant 0 : i32
    %c0_i32_0 = arith.constant 0 : i32
    %c0_i32_1 = arith.constant 0 : i32
    return %c0_i32, %c0_i32_0 : i32, i32
  }
  func.func @transform_6(%arg0: i32, %arg1: i32) -> (i32, i32) {
    %c0_i32 = arith.constant 0 : i32
    %c0_i32_0 = arith.constant 0 : i32
    %c0_i32_1 = arith.constant 0 : i32
    return %c0_i32, %c0_i32_0 : i32, i32
  }
  func.func @transform_7(%arg0: i32, %arg1: i32) -> (i32, i32) {
    %c0_i32 = arith.constant 0 : i32
    %c0_i32_0 = arith.constant 0 : i32
    %c0_i32_1 = arith.constant 0 : i32
    return %c0_i32, %c0_i32_0 : i32, i32
  }
  func.func @transform_8(%arg0: i32, %arg1: i32) -> (i32, i32, i32) {
    %c0_i32 = arith.constant 0 : i32
    %c0_i32_0 = arith.constant 0 : i32
    return %arg0, %arg1, %c0_i32 : i32, i32, i32
  }
}

module attributes {stable_mosaic.version = 11 : i64} {
  func.func @_residual_block_kernel(%arg0: i32, %arg1: i32, %arg2: memref<1x16x128xf32, #tpu.memory_space<vmem>>, %arg3: memref<1x1x2x128xf32, #tpu.memory_space<vmem>>, %arg4: memref<1x128xf32, #tpu.memory_space<vmem>>, %arg5: memref<1x128xf32, #tpu.memory_space<vmem>>, %arg6: memref<384x256xbf16, #tpu.memory_space<vmem>>, %arg7: memref<1x256xf32, #tpu.memory_space<vmem>>, %arg8: memref<128x128xbf16, #tpu.memory_space<vmem>>, %arg9: memref<1x128xf32, #tpu.memory_space<vmem>>, %arg10: memref<1x16x128xf32, #tpu.memory_space<vmem>>) attributes {dimension_semantics = [#tpu.dimension_semantics<parallel>, #tpu.dimension_semantics<parallel>], iteration_bounds = array<i64: 2, 1>, scalar_prefetch = 0 : i64, scratch_operands = 0 : i64, tpu.core_type = #tpu.core_type<tc>, window_params = [{transform_indices = @transform_0, window_bounds = array<i64: 1, 16, 128>}, {transform_indices = @transform_1, window_bounds = array<i64: 1, 1, 2, 128>}, {pipeline_mode = #tpu.pipeline_mode<synchronous>, transform_indices = @transform_2, window_bounds = array<i64: 1, 128>}, {pipeline_mode = #tpu.pipeline_mode<synchronous>, transform_indices = @transform_3, window_bounds = array<i64: 1, 128>}, {pipeline_mode = #tpu.pipeline_mode<synchronous>, transform_indices = @transform_4, window_bounds = array<i64: 384, 256>}, {pipeline_mode = #tpu.pipeline_mode<synchronous>, transform_indices = @transform_5, window_bounds = array<i64: 1, 256>}, {pipeline_mode = #tpu.pipeline_mode<synchronous>, transform_indices = @transform_6, window_bounds = array<i64: 128, 128>}, {pipeline_mode = #tpu.pipeline_mode<synchronous>, transform_indices = @transform_7, window_bounds = array<i64: 1, 128>}, {transform_indices = @transform_8, window_bounds = array<i64: 1, 16, 128>}]} {
    %c0 = arith.constant 0 : index
    %c0_0 = arith.constant 0 : index
    %c0_1 = arith.constant 0 : index
    %0 = vector.load %arg2[%c0, %c0_0, %c0_1] : memref<1x16x128xf32, #tpu.memory_space<vmem>>, vector<1x16x128xf32>
    %1 = vector.shape_cast %0 : vector<1x16x128xf32> to vector<16x128xf32>
    %c0_2 = arith.constant 0 : index
    %c0_3 = arith.constant 0 : index
    %2 = vector.load %arg4[%c0_2, %c0_3] : memref<1x128xf32, #tpu.memory_space<vmem>>, vector<1x128xf32>
    %3 = vector.broadcast %2 : vector<1x128xf32> to vector<16x128xf32>
    %4 = arith.mulf %1, %3 : vector<16x128xf32>
    %c0_4 = arith.constant 0 : index
    %c0_5 = arith.constant 0 : index
    %5 = vector.load %arg5[%c0_4, %c0_5] : memref<1x128xf32, #tpu.memory_space<vmem>>, vector<1x128xf32>
    %6 = vector.broadcast %5 : vector<1x128xf32> to vector<16x128xf32>
    %7 = arith.addf %4, %6 : vector<16x128xf32>
    %c0_6 = arith.constant 0 : index
    %c0_7 = arith.constant 0 : index
    %c0_8 = arith.constant 0 : index
    %c0_9 = arith.constant 0 : index
    %8 = vector.load %arg3[%c0_6, %c0_7, %c0_8, %c0_9] : memref<1x1x2x128xf32, #tpu.memory_space<vmem>>, vector<1x1x2x128xf32>
    %9 = vector.shape_cast %8 : vector<1x1x2x128xf32> to vector<2x128xf32>
    %10 = vector.extract_strided_slice %9 {offsets = [0, 0], sizes = [1, 128], strides = [1, 1]} : vector<2x128xf32> to vector<1x128xf32>
    %11 = vector.extract_strided_slice %9 {offsets = [1, 0], sizes = [1, 128], strides = [1, 1]} : vector<2x128xf32> to vector<1x128xf32>
    %12 = tpu.concatenate %10, %7, %11 in 0 : vector<1x128xf32>, vector<16x128xf32>, vector<1x128xf32> -> vector<18x128xf32>
    %13 = vector.extract_strided_slice %12 {offsets = [0, 0], sizes = [16, 128], strides = [1, 1]} : vector<18x128xf32> to vector<16x128xf32>
    %14 = vector.extract_strided_slice %12 {offsets = [1, 0], sizes = [16, 128], strides = [1, 1]} : vector<18x128xf32> to vector<16x128xf32>
    %15 = vector.extract_strided_slice %12 {offsets = [2, 0], sizes = [16, 128], strides = [1, 1]} : vector<18x128xf32> to vector<16x128xf32>
    %16 = tpu.concatenate %13, %14, %15 in 1 : vector<16x128xf32>, vector<16x128xf32>, vector<16x128xf32> -> vector<16x384xf32>
    %17 = arith.truncf %16 : vector<16x384xf32> to vector<16x384xbf16>
    %c0_10 = arith.constant 0 : index
    %c0_11 = arith.constant 0 : index
    %18 = vector.load %arg6[%c0_10, %c0_11] : memref<384x256xbf16, #tpu.memory_space<vmem>>, vector<384x256xbf16>
    %cst = arith.constant dense<0.000000e+00> : vector<16x256xf32>
    %19 = tpu.matmul %17, %18, %cst {dimension_numbers = #tpu.dot_dimension_numbers<[1], [0], [0], [1], [0, 0, 1, 1], [], []>} : vector<16x384xbf16>, vector<384x256xbf16>, vector<16x256xf32> -> vector<16x256xf32>
    %c0_12 = arith.constant 0 : index
    %c0_13 = arith.constant 0 : index
    %20 = vector.load %arg7[%c0_12, %c0_13] : memref<1x256xf32, #tpu.memory_space<vmem>>, vector<1x256xf32>
    %21 = vector.broadcast %20 : vector<1x256xf32> to vector<16x256xf32>
    %22 = arith.addf %19, %21 : vector<16x256xf32>
    %23 = vector.extract_strided_slice %22 {offsets = [0, 0], sizes = [16, 128], strides = [1, 1]} : vector<16x256xf32> to vector<16x128xf32>
    %24 = vector.extract_strided_slice %22 {offsets = [0, 128], sizes = [16, 128], strides = [1, 1]} : vector<16x256xf32> to vector<16x128xf32>
    %cst_14 = arith.constant 0.000000e+00 : f32
    %25 = vector.broadcast %cst_14 : f32 to vector<16x128xf32>
    %26 = arith.subf %25, %24 : vector<16x128xf32>
    %27 = math.exp %26 : vector<16x128xf32>
    %cst_15 = arith.constant 1.000000e+00 : f32
    %28 = vector.broadcast %cst_15 : f32 to vector<16x128xf32>
    %29 = arith.addf %28, %27 : vector<16x128xf32>
    %30 = tpu.reciprocal %29 {approx = true} : vector<16x128xf32> -> vector<16x128xf32>
    %31 = arith.mulf %23, %30 : vector<16x128xf32>
    %32 = arith.truncf %31 : vector<16x128xf32> to vector<16x128xbf16>
    %c0_16 = arith.constant 0 : index
    %c0_17 = arith.constant 0 : index
    %33 = vector.load %arg8[%c0_16, %c0_17] : memref<128x128xbf16, #tpu.memory_space<vmem>>, vector<128x128xbf16>
    %cst_18 = arith.constant dense<0.000000e+00> : vector<16x128xf32>
    %34 = tpu.matmul %32, %33, %cst_18 {dimension_numbers = #tpu.dot_dimension_numbers<[1], [0], [0], [1], [0, 0, 1, 1], [], []>} : vector<16x128xbf16>, vector<128x128xbf16>, vector<16x128xf32> -> vector<16x128xf32>
    %c0_19 = arith.constant 0 : index
    %c0_20 = arith.constant 0 : index
    %35 = vector.load %arg9[%c0_19, %c0_20] : memref<1x128xf32, #tpu.memory_space<vmem>>, vector<1x128xf32>
    %36 = vector.broadcast %35 : vector<1x128xf32> to vector<16x128xf32>
    %37 = arith.addf %34, %36 : vector<16x128xf32>
    %38 = arith.addf %1, %37 : vector<16x128xf32>
    %c0_21 = arith.constant 0 : index
    %c0_22 = arith.constant 0 : index
    %c0_23 = arith.constant 0 : index
    %39 = vector.load %arg10[%c0_21, %c0_22, %c0_23] : memref<1x16x128xf32, #tpu.memory_space<vmem>>, vector<1x16x128xf32>
    %40 = vector.shape_cast %39 : vector<1x16x128xf32> to vector<16x128xf32>
    %41 = vector.shape_cast %38 : vector<16x128xf32> to vector<1x16x128xf32>
    tpu.vector_store %arg10[%c0_21, %c0_22, %c0_23], %41 {strides = array<i32>} : memref<1x16x128xf32, #tpu.memory_space<vmem>>, vector<1x16x128xf32>,
    return
  }
  func.func @transform_0(%arg0: i32, %arg1: i32) -> (i32, i32, i32) {
    %c0_i32 = arith.constant 0 : i32
    %c0_i32_0 = arith.constant 0 : i32
    return %arg0, %arg1, %c0_i32 : i32, i32, i32
  }
  func.func @transform_1(%arg0: i32, %arg1: i32) -> (i32, i32, i32, i32) {
    %c0_i32 = arith.constant 0 : i32
    %c0_i32_0 = arith.constant 0 : i32
    %c0_i32_1 = arith.constant 0 : i32
    return %arg0, %arg1, %c0_i32, %c0_i32_0 : i32, i32, i32, i32
  }
  func.func @transform_2(%arg0: i32, %arg1: i32) -> (i32, i32) {
    %c0_i32 = arith.constant 0 : i32
    %c0_i32_0 = arith.constant 0 : i32
    %c0_i32_1 = arith.constant 0 : i32
    return %c0_i32, %c0_i32_0 : i32, i32
  }
  func.func @transform_3(%arg0: i32, %arg1: i32) -> (i32, i32) {
    %c0_i32 = arith.constant 0 : i32
    %c0_i32_0 = arith.constant 0 : i32
    %c0_i32_1 = arith.constant 0 : i32
    return %c0_i32, %c0_i32_0 : i32, i32
  }
  func.func @transform_4(%arg0: i32, %arg1: i32) -> (i32, i32) {
    %c0_i32 = arith.constant 0 : i32
    %c0_i32_0 = arith.constant 0 : i32
    %c0_i32_1 = arith.constant 0 : i32
    return %c0_i32, %c0_i32_0 : i32, i32
  }
  func.func @transform_5(%arg0: i32, %arg1: i32) -> (i32, i32) {
    %c0_i32 = arith.constant 0 : i32
    %c0_i32_0 = arith.constant 0 : i32
    %c0_i32_1 = arith.constant 0 : i32
    return %c0_i32, %c0_i32_0 : i32, i32
  }
  func.func @transform_6(%arg0: i32, %arg1: i32) -> (i32, i32) {
    %c0_i32 = arith.constant 0 : i32
    %c0_i32_0 = arith.constant 0 : i32
    %c0_i32_1 = arith.constant 0 : i32
    return %c0_i32, %c0_i32_0 : i32, i32
  }
  func.func @transform_7(%arg0: i32, %arg1: i32) -> (i32, i32) {
    %c0_i32 = arith.constant 0 : i32
    %c0_i32_0 = arith.constant 0 : i32
    %c0_i32_1 = arith.constant 0 : i32
    return %c0_i32, %c0_i32_0 : i32, i32
  }
  func.func @transform_8(%arg0: i32, %arg1: i32) -> (i32, i32, i32) {
    %c0_i32 = arith.constant 0 : i32
    %c0_i32_0 = arith.constant 0 : i32
    return %arg0, %arg1, %c0_i32 : i32, i32, i32
  }
}

</mosaic_0001>

<llo_original>
// kernel: tpu_custom_call.1
$region0: #{tpu_custom_call.1}
  #allocation0 [shape = 'u32[]', space=smem, size = 0x4, offset = 0x4, fixed_abs, tag = 'smem constant byte address 0x4 - core index']
  #allocation1 [shape = 'u32[144,128]{1,0:T(1,128)}', space=vmem, size = 0x12000, scoped, tag = 'internal scratch']
  %s0 = inlined_call_operand.hbm [shape: f32[2,16,128], index: 0, kind: input, shape index: {}]
  %s1 = inlined_call_operand.hbm [shape: f32[2,1,2,128], index: 1, kind: input, shape index: {}]
  %s2 = inlined_call_operand.vmem [shape: f32[1,128], index: 2, kind: input, shape index: {}]
  %s3 = inlined_call_operand.vmem [shape: f32[1,128], index: 3, kind: input, shape index: {}]
  %s4 = inlined_call_operand.hbm [shape: bf16[384,256], index: 4, kind: input, shape index: {}]
  %s5 = inlined_call_operand.vmem [shape: f32[1,256], index: 5, kind: input, shape index: {}]
  %s6 = inlined_call_operand.hbm [shape: bf16[128,128], index: 6, kind: input, shape index: {}]
  %s7 = inlined_call_operand.vmem [shape: f32[1,128], index: 7, kind: input, shape index: {}]
  %s8 = inlined_call_operand.hbm [shape: f32[2,16,128], index: 8, kind: output, shape index: {}]
  %s9 = sld [smem:[#allocation0]]
  $region81: #{tpu_custom_call.1} parent=0
    _
  %s11 = ssub.s32 1, %s9
  %s12 = scalar_select 0, %s11, %s9
  $region1: #{tpu_custom_call.1} parent=0
    #allocation2 [shape = 'u8[16384]{0}', space=vmem, size = 0x4000, scoped, tag = 'input window, operand 0']
    #allocation3 [shape = 's32[2]{0}', space=sflag, size = 0x8, scoped, tag = 'scoped memory for tpu_custom_call.1']
    #allocation4 [shape = 's32[2]{0}', space=sflag, size = 0x8, scoped, tag = 'scoped memory for tpu_custom_call.1']
    #allocation5 [shape = 'u8[2048]{0}', space=vmem, size = 0x800, scoped, tag = 'input window, operand 1']
    #allocation6 [shape = 's32[2]{0}', space=sflag, size = 0x8, scoped, tag = 'scoped memory for tpu_custom_call.1']
    #allocation7 [shape = 'u8[196608]{0}', space=vmem, size = 0x30000, scoped, tag = 'input window, operand 4, single buffered']
    #allocation8 [shape = 'u8[32768]{0}', space=vmem, size = 0x8000, scoped, tag = 'input window, operand 6, single buffered']
    #allocation9 [shape = 's32[1]{0}', space=sflag, size = 0x4, scoped, tag = 'scoped memory for tpu_custom_call.1']
    #allocation10 [shape = 'u8[16384]{0}', space=vmem, size = 0x4000, scoped, tag = 'output window, operand 0']
    %13 = vsyncpa [#allocation3], 0
    %s14 = scalar_lea.sflag [#allocation3], 1
    %15 = vsyncpa %s14, 0
    %16 = vsyncpa [#allocation6], 0
    %s17 = scalar_lea.sflag [#allocation6], 1
    %18 = vsyncpa %s17, 0
    %19 = vsyncpa [#allocation9], 0
    %20 = vsyncpa [#allocation4], 0
    %s21 = scalar_lea.sflag [#allocation4], 1
    %22 = vsyncpa %s21, 0
    loop: start=0, step=1, limit=4
    $region2: #{tpu_custom_call.1} parent=1 // loop_pre_header
      _
    $region3: #{tpu_custom_call.1} parent=1 // loop_header
      %s24 = sphi 0, %s28
      %p25 = scmp.ge.s32.totalorder %s24, 4
      %s31 = sphi 0, %s43
      %s32 = sphi 0, %s39
      %s33 = sphi 0, %s31
      %s34 = sphi 0, %s32
      %s35 = sphi 0, %s33
      %s36 = sphi 0, %s34
      %s48 = sphi 0, %s50
      %s51 = sphi 0, %s48
      %s52 = sphi 0, %s51
      %s68 = sphi 0, %s52
      %s76 = sphi 0, %s78
      %s79 = sphi 0, %s76
      %s80 = sphi 0, %s79
      %s96 = sphi 0, %s80
      %s100 = sphi 0, %s100
      %s102 = sphi 0, %s100
      %s103 = sphi 0, %s102
      %s117 = sphi 0, %s103
      %s121 = sphi 0, %s121
      %s123 = sphi 0, %s121
      %s124 = sphi 0, %s123
      %s138 = sphi 0, %s124
      %s142 = sphi 0, %s142
      %s144 = sphi 0, %s142
      %s145 = sphi 0, %s144
      %s159 = sphi 0, %s145
      %s163 = sphi 0, %s163
      %s165 = sphi 0, %s163
      %s166 = sphi 0, %s165
      %s180 = sphi 0, %s166
      %s184 = sphi 0, %s184
      %s186 = sphi 0, %s184
      %s187 = sphi 0, %s186
      %s201 = sphi 0, %s187
      %s205 = sphi 0, %s205
      %s207 = sphi 0, %s205
      %s208 = sphi 0, %s207
      %s222 = sphi 0, %s208
      %s230 = sphi 0, %s232
      %s233 = sphi 0, %s230
      %s234 = sphi 0, %s233
      %s250 = sphi 0, %s234
    $region4: #{tpu_custom_call.1} parent=1 // loop_header_branch
      %27 = sbr.rel (%p25) target = $region8
    $region5: #{tpu_custom_call.1} parent=1 // loop_body
      %s29 = ssub.s32 %s24, 1
      %s30 = ssub.s32 %s24, 2
      %s37 = sadd.s32 1, %s32
      %p38 = scmp.ge.s32.totalorder %s37, 1
      %s39 = scalar_select %p38, 0, %s37
      %s40 = sadd.s32 1, %s31
      %s41 = scalar_select %p38, %s40, %s31
      %p42 = scmp.ge.s32.totalorder %s41, 2
      %s43 = scalar_select %p42, 0, %s41
      %s44 = ssub.s32 %s31, %s43
      %s45 = ssub.s32 %s32, %s39
      %s46 = sor.u32 %s44, %s45
      %p47 = scmp.eq.s32.totalorder %s46, 0
      %s49 = sadd.s32 %s48, 1
      %s50 = scalar_select %p47, %s48, %s49
      %p53 = pneg %p47
      %p54 = scmp.eq.s32.totalorder %s24, 1
      %p55 = por %p53, %p54
      %p56 = scmp.ne.s32.totalorder %s48, %s51
      %p57 = scmp.eq.s32.totalorder %s24, 0
      %p58 = por %p56, %p57
      %p59 = scmp.ne.s32.totalorder %s48, %s51
      %p60 = scmp.eq.s32.totalorder %s29, 1
      %p61 = por %p59, %p60
      %p62 = scmp.ne.s32.totalorder %s51, %s52
      %p63 = scmp.eq.s32.totalorder %s29, 0
      %p64 = por %p62, %p63
      %p65 = scmp.ne.s32.totalorder %s51, %s52
      %p66 = scmp.eq.s32.totalorder %s30, 1
      %p67 = por %p65, %p66
      %p69 = scmp.ne.s32.totalorder %s52, %s68
      %p70 = scmp.eq.s32.totalorder %s30, 0
      %p71 = por %p69, %p70
      %s72 = ssub.s32 %s31, %s43
      %s73 = ssub.s32 %s32, %s39
      %s74 = sor.u32 %s72, %s73
      %p75 = scmp.eq.s32.totalorder %s74, 0
      %s77 = sadd.s32 %s76, 1
      %s78 = scalar_select %p75, %s76, %s77
      %p81 = pneg %p75
      %p82 = scmp.eq.s32.totalorder %s24, 1
      %p83 = por %p81, %p82
      %p84 = scmp.ne.s32.totalorder %s76, %s79
      %p85 = scmp.eq.s32.totalorder %s24, 0
      %p86 = por %p84, %p85
      %p87 = scmp.ne.s32.totalorder %s76, %s79
      %p88 = scmp.eq.s32.totalorder %s29, 1
      %p89 = por %p87, %p88
      %p90 = scmp.ne.s32.totalorder %s79, %s80
      %p91 = scmp.eq.s32.totalorder %s29, 0
      %p92 = por %p90, %p91
      %p93 = scmp.ne.s32.totalorder %s79, %s80
      %p94 = scmp.eq.s32.totalorder %s30, 1
      %p95 = por %p93, %p94
      %p97 = scmp.ne.s32.totalorder %s80, %s96
      %p98 = scmp.eq.s32.totalorder %s30, 0
      %p99 = por %p97, %p98
      %s101 = sadd.s32 %s100, 1
      %p104 = scmp.eq.s32.totalorder %s24, 1
      %p105 = scmp.ne.s32.totalorder %s100, %s102
      %p106 = scmp.eq.s32.totalorder %s24, 0
      %p107 = por %p105, %p106
      %p108 = scmp.ne.s32.totalorder %s100, %s102
      %p109 = scmp.eq.s32.totalorder %s29, 1
      %p110 = por %p108, %p109
      %p111 = scmp.ne.s32.totalorder %s102, %s103
      %p112 = scmp.eq.s32.totalorder %s29, 0
      %p113 = por %p111, %p112
      %p114 = scmp.ne.s32.totalorder %s102, %s103
      %p115 = scmp.eq.s32.totalorder %s30, 1
      %p116 = por %p114, %p115
      %p118 = scmp.ne.s32.totalorder %s103, %s117
      %p119 = scmp.eq.s32.totalorder %s30, 0
      %p120 = por %p118, %p119
      %s122 = sadd.s32 %s121, 1
      %p125 = scmp.eq.s32.totalorder %s24, 1
      %p126 = scmp.ne.s32.totalorder %s121, %s123
      %p127 = scmp.eq.s32.totalorder %s24, 0
      %p128 = por %p126, %p127
      %p129 = scmp.ne.s32.totalorder %s121, %s123
      %p130 = scmp.eq.s32.totalorder %s29, 1
      %p131 = por %p129, %p130
      %p132 = scmp.ne.s32.totalorder %s123, %s124
      %p133 = scmp.eq.s32.totalorder %s29, 0
      %p134 = por %p132, %p133
      %p135 = scmp.ne.s32.totalorder %s123, %s124
      %p136 = scmp.eq.s32.totalorder %s30, 1
      %p137 = por %p135, %p136
      %p139 = scmp.ne.s32.totalorder %s124, %s138
      %p140 = scmp.eq.s32.totalorder %s30, 0
      %p141 = por %p139, %p140
      %s143 = sadd.s32 %s142, 1
      %p146 = scmp.eq.s32.totalorder %s24, 1
      %p147 = scmp.ne.s32.totalorder %s142, %s144
      %p148 = scmp.eq.s32.totalorder %s24, 0
      %p149 = por %p147, %p148
      %p150 = scmp.ne.s32.totalorder %s142, %s144
      %p151 = scmp.eq.s32.totalorder %s29, 1
      %p152 = por %p150, %p151
      %p153 = scmp.ne.s32.totalorder %s144, %s145
      %p154 = scmp.eq.s32.totalorder %s29, 0
      %p155 = por %p153, %p154
      %p156 = scmp.ne.s32.totalorder %s144, %s145
      %p157 = scmp.eq.s32.totalorder %s30, 1
      %p158 = por %p156, %p157
      %p160 = scmp.ne.s32.totalorder %s145, %s159
      %p161 = scmp.eq.s32.totalorder %s30, 0
      %p162 = por %p160, %p161
      %s164 = sadd.s32 %s163, 1
      %p167 = scmp.eq.s32.totalorder %s24, 1
      %p168 = scmp.ne.s32.totalorder %s163, %s165
      %p169 = scmp.eq.s32.totalorder %s24, 0
      %p170 = por %p168, %p169
      %p171 = scmp.ne.s32.totalorder %s163, %s165
      %p172 = scmp.eq.s32.totalorder %s29, 1
      %p173 = por %p171, %p172
      %p174 = scmp.ne.s32.totalorder %s165, %s166
      %p175 = scmp.eq.s32.totalorder %s29, 0
      %p176 = por %p174, %p175
      %p177 = scmp.ne.s32.totalorder %s165, %s166
      %p178 = scmp.eq.s32.totalorder %s30, 1
      %p179 = por %p177, %p178
      %p181 = scmp.ne.s32.totalorder %s166, %s180
      %p182 = scmp.eq.s32.totalorder %s30, 0
      %p183 = por %p181, %p182
      %s185 = sadd.s32 %s184, 1
      %p188 = scmp.eq.s32.totalorder %s24, 1
      %p189 = scmp.ne.s32.totalorder %s184, %s186
      %p190 = scmp.eq.s32.totalorder %s24, 0
      %p191 = por %p189, %p190
      %p192 = scmp.ne.s32.totalorder %s184, %s186
      %p193 = scmp.eq.s32.totalorder %s29, 1
      %p194 = por %p192, %p193
      %p195 = scmp.ne.s32.totalorder %s186, %s187
      %p196 = scmp.eq.s32.totalorder %s29, 0
      %p197 = por %p195, %p196
      %p198 = scmp.ne.s32.totalorder %s186, %s187
      %p199 = scmp.eq.s32.totalorder %s30, 1
      %p200 = por %p198, %p199
      %p202 = scmp.ne.s32.totalorder %s187, %s201
      %p203 = scmp.eq.s32.totalorder %s30, 0
      %p204 = por %p202, %p203
      %s206 = sadd.s32 %s205, 1
      %p209 = scmp.eq.s32.totalorder %s24, 1
      %p210 = scmp.ne.s32.totalorder %s205, %s207
      %p211 = scmp.eq.s32.totalorder %s24, 0
      %p212 = por %p210, %p211
      %p213 = scmp.ne.s32.totalorder %s205, %s207
      %p214 = scmp.eq.s32.totalorder %s29, 1
      %p215 = por %p213, %p214
      %p216 = scmp.ne.s32.totalorder %s207, %s208
      %p217 = scmp.eq.s32.totalorder %s29, 0
      %p218 = por %p216, %p217
      %p219 = scmp.ne.s32.totalorder %s207, %s208
      %p220 = scmp.eq.s32.totalorder %s30, 1
      %p221 = por %p219, %p220
      %p223 = scmp.ne.s32.totalorder %s208, %s222
      %p224 = scmp.eq.s32.totalorder %s30, 0
      %p225 = por %p223, %p224
      %s226 = ssub.s32 %s31, %s43
      %s227 = ssub.s32 %s32, %s39
      %s228 = sor.u32 %s226, %s227
      %p229 = scmp.eq.s32.totalorder %s228, 0
      %s231 = sadd.s32 %s230, 1
      %s232 = scalar_select %p229, %s230, %s231
      %p235 = pneg %p229
      %p236 = scmp.eq.s32.totalorder %s24, 1
      %p237 = por %p235, %p236
      %p238 = scmp.ne.s32.totalorder %s230, %s233
      %p239 = scmp.eq.s32.totalorder %s24, 0
      %p240 = por %p238, %p239
      %p241 = scmp.ne.s32.totalorder %s230, %s233
      %p242 = scmp.eq.s32.totalorder %s29, 1
      %p243 = por %p241, %p242
      %p244 = scmp.ne.s32.totalorder %s233, %s234
      %p245 = scmp.eq.s32.totalorder %s29, 0
      %p246 = por %p244, %p245
      %p247 = scmp.ne.s32.totalorder %s233, %s234
      %p248 = scmp.eq.s32.totalorder %s30, 1
      %p249 = por %p247, %p248
      %p251 = scmp.ne.s32.totalorder %s234, %s250
      %p252 = scmp.eq.s32.totalorder %s30, 0
      %p253 = por %p251, %p252
      %p254 = scmp.le.s32.totalorder 1, %s24
      %p255 = scmp.lt.s32.totalorder %s24, 3
      %p256 = pnand %p254, %p255
      %p257 = pneg %p256
      // Predicated region
      $region9: #{tpu_custom_call.1} parent=5 // pred_check
        _
      $region10: #{tpu_custom_call.1} parent=5 // pred_check_branch
        %259 = sbr.rel (%p256) target = $region12
      $region11: #{tpu_custom_call.1} parent=5 // pred_region
        %s260 = ssub.s32 %s24, 1
        // Predicated region
        $region13: #{tpu_custom_call.1} parent=11 // pred_check
          %p261 = pneg %p113
        $region14: #{tpu_custom_call.1} parent=11 // pred_check_branch
          %263 = sbr.rel (%p261) target = $region16
        $region15: #{tpu_custom_call.1} parent=11 // pred_region
          _
        $region16: #{tpu_custom_call.1} parent=11 // pred_fallthru
          _
        // Predicated region
        $region17: #{tpu_custom_call.1} parent=11 // pred_check
          %p264 = pneg %p134
        $region18: #{tpu_custom_call.1} parent=11 // pred_check_branch
          %266 = sbr.rel (%p264) target = $region20
        $region19: #{tpu_custom_call.1} parent=11 // pred_region
          _
        $region20: #{tpu_custom_call.1} parent=11 // pred_fallthru
          _
        // Predicated region
        $region21: #{tpu_custom_call.1} parent=11 // pred_check
          %p267 = pneg %p155
        $region22: #{tpu_custom_call.1} parent=11 // pred_check_branch
          %269 = sbr.rel (%p267) target = $region24
        $region23: #{tpu_custom_call.1} parent=11 // pred_region
          %s271 = ssub.s32 6144, 6144
          %272 = vsyncadd [#allocation6], %s271
          %s273 = sshll.u32 [#allocation7], 4
          %s274 = int_to_ptr.vmem [resolvable:$true] %s273
          %279 = dma.hbm_to_vmem [thread:$0]  %s4, 6144, %s274, [#allocation6], 128, 128, 8
        $region24: #{tpu_custom_call.1} parent=11 // pred_fallthru
          _
        // Predicated region
        $region25: #{tpu_custom_call.1} parent=11 // pred_check
          %p280 = pneg %p176
        $region26: #{tpu_custom_call.1} parent=11 // pred_check_branch
          %282 = sbr.rel (%p280) target = $region28
        $region27: #{tpu_custom_call.1} parent=11 // pred_region
          _
        $region28: #{tpu_custom_call.1} parent=11 // pred_fallthru
          _
        // Predicated region
        $region29: #{tpu_custom_call.1} parent=11 // pred_check
          %p283 = pneg %p197
        $region30: #{tpu_custom_call.1} parent=11 // pred_check_branch
          %285 = sbr.rel (%p283) target = $region32
        $region31: #{tpu_custom_call.1} parent=11 // pred_region
          %s287 = ssub.s32 1024, 1024
          %288 = vsyncadd [#allocation9], %s287
          %s289 = sshll.u32 [#allocation8], 4
          %s290 = int_to_ptr.vmem [resolvable:$true] %s289
          %295 = dma.hbm_to_vmem [thread:$0]  %s6, 1024, %s290, [#allocation9], 64, 64, 4
        $region32: #{tpu_custom_call.1} parent=11 // pred_fallthru
          _
        // Predicated region
        $region33: #{tpu_custom_call.1} parent=11 // pred_check
          %p296 = pneg %p218
        $region34: #{tpu_custom_call.1} parent=11 // pred_check_branch
          %298 = sbr.rel (%p296) target = $region36
        $region35: #{tpu_custom_call.1} parent=11 // pred_region
          _
        $region36: #{tpu_custom_call.1} parent=11 // pred_fallthru
          _
      $region12: #{tpu_custom_call.1} parent=5 // pred_fallthru
        _
      %p299 = scmp.lt.s32.totalorder %s24, 2
      // Predicated region
      $region37: #{tpu_custom_call.1} parent=5 // pred_check
        %p300 = pneg %p299
      $region38: #{tpu_custom_call.1} parent=5 // pred_check_branch
        %302 = sbr.rel (%p300) target = $region40
      $region39: #{tpu_custom_call.1} parent=5 // pred_region
        // Predicated region
        $region41: #{tpu_custom_call.1} parent=39 // pred_check
          %p303 = pneg %p58
        $region42: #{tpu_custom_call.1} parent=39 // pred_check_branch
          %305 = sbr.rel (%p303) target = $region44
        $region43: #{tpu_custom_call.1} parent=39 // pred_region
          %s306 = sand.u32 %s48, 1
          %s307 = scalar_lea.sflag [#allocation3], %s306
          %s308 = sand.u32 %s48, 1
          %s309 = smul.addr %s308, 16
          %s310 = scalar_lea.vmem [#allocation2], %s309
          %s311 = smul.u32 2, %s32
          %s313 = ssub.s32 256, 256
          %314 = vsyncadd %s307, %s313
          %s315 = smul.addr %s31, 2
          %s316 = sadd.s32 %s311, %s315
          %s317 = smul.addr %s316, 128
          %s318 = scalar_lea.hbm %s0, %s317
          %s319 = sshll.u32 %s310, 4
          %s320 = int_to_ptr.vmem [resolvable:$true] %s319
          %325 = dma.hbm_to_vmem [thread:$0]  %s318, 256, %s320, %s307, 128, 128, 8
        $region44: #{tpu_custom_call.1} parent=39 // pred_fallthru
          _
        // Predicated region
        $region45: #{tpu_custom_call.1} parent=39 // pred_check
          %p326 = pneg %p86
        $region46: #{tpu_custom_call.1} parent=39 // pred_check_branch
          %328 = sbr.rel (%p326) target = $region48
        $region47: #{tpu_custom_call.1} parent=39 // pred_region
          %s329 = sand.u32 %s24, 1
          %s330 = scalar_lea.sflag [#allocation6], %s329
          %s331 = sand.u32 %s76, 1
          %s332 = smul.addr %s331, 2
          %s333 = scalar_lea.vmem [#allocation5], %s332
          %s335 = ssub.s32 32, 32
          %336 = vsyncadd %s330, %s335
          %s337 = sadd.s32 %s32, %s31
          %s338 = smul.addr %s337, 32
          %s339 = scalar_lea.hbm %s1, %s338
          %s341 = sshll.u32 %s333, 4
          %s342 = int_to_ptr.vmem [resolvable:$true] %s341
          %344 = dma.hbm_to_vmem [thread:$0]  %s339, 32, %s342, %s330
        $region48: #{tpu_custom_call.1} parent=39 // pred_fallthru
          _
      $region40: #{tpu_custom_call.1} parent=5 // pred_fallthru
        _
      %p345 = scmp.le.s32.totalorder 1, %s24
      %p346 = scmp.lt.s32.totalorder %s24, 3
      %p347 = pnand %p345, %p346
      %p348 = pneg %p347
      // Predicated region
      $region49: #{tpu_custom_call.1} parent=5 // pred_check
        _
      $region50: #{tpu_custom_call.1} parent=5 // pred_check_branch
        %350 = sbr.rel (%p347) target = $region52
      $region51: #{tpu_custom_call.1} parent=5 // pred_region
        %s351 = ssub.s32 %s24, 1
        %s352 = sand.u32 %s51, 1
        %s353 = scalar_lea.sflag [#allocation3], %s352
        %s354 = sand.u32 %s51, 1
        %s355 = smul.addr %s354, 16
        %s356 = scalar_lea.vmem [#allocation2], %s355
        // Predicated region
        $region53: #{tpu_custom_call.1} parent=51 // pred_check
          %p357 = pneg %p64
        $region54: #{tpu_custom_call.1} parent=51 // pred_check_branch
          %359 = sbr.rel (%p357) target = $region56
        $region55: #{tpu_custom_call.1} parent=51 // pred_region
          %360 = dma.done %s353, 256
        $region56: #{tpu_custom_call.1} parent=51 // pred_fallthru
          _
        %s361 = sand.u32 %s29, 1
        %s362 = scalar_lea.sflag [#allocation6], %s361
        %s363 = sand.u32 %s79, 1
        %s364 = smul.addr %s363, 2
        %s365 = scalar_lea.vmem [#allocation5], %s364
        // Predicated region
        $region57: #{tpu_custom_call.1} parent=51 // pred_check
          %p366 = pneg %p92
        $region58: #{tpu_custom_call.1} parent=51 // pred_check_branch
          %368 = sbr.rel (%p366) target = $region60
        $region59: #{tpu_custom_call.1} parent=51 // pred_region
          %369 = dma.done %s362, 32
        $region60: #{tpu_custom_call.1} parent=51 // pred_fallthru
          _
        // Predicated region
        $region61: #{tpu_custom_call.1} parent=51 // pred_check
          %p370 = pneg %p155
        $region62: #{tpu_custom_call.1} parent=51 // pred_check_branch
          %372 = sbr.rel (%p370) target = $region64
        $region63: #{tpu_custom_call.1} parent=51 // pred_region
          %373 = dma.done [#allocation6], 6144
        $region64: #{tpu_custom_call.1} parent=51 // pred_fallthru
          _
        // Predicated region
        $region65: #{tpu_custom_call.1} parent=51 // pred_check
          %p374 = pneg %p197
        $region66: #{tpu_custom_call.1} parent=51 // pred_check_branch
          %376 = sbr.rel (%p374) target = $region68
        $region67: #{tpu_custom_call.1} parent=51 // pred_region
          %377 = dma.done [#allocation9], 1024
        $region68: #{tpu_custom_call.1} parent=51 // pred_fallthru
          _
        %s378 = sand.u32 %s51, 1
        %s379 = scalar_lea.sflag [#allocation3], %s378
        %s380 = sand.u32 %s51, 1
        %s381 = smul.addr %s380, 16
        %s382 = scalar_lea.vmem [#allocation2], %s381
        %p383 = pneg %p64
        %p384 = pneg %p61
        %s385 = sand.u32 %s29, 1
        %s386 = scalar_lea.sflag [#allocation6], %s385
        %s387 = sand.u32 %s79, 1
        %s388 = smul.addr %s387, 2
        %s389 = scalar_lea.vmem [#allocation5], %s388
        %p390 = pneg %p92
        %p391 = pneg %p89
        %p392 = pneg %p113
        %p393 = pneg %p110
        %p394 = pneg %p134
        %p395 = pneg %p131
        %p396 = pneg %p155
        %p397 = pneg %p152
        %p398 = pneg %p176
        %p399 = pneg %p173
        %p400 = pneg %p197
        %p401 = pneg %p194
        %p402 = pneg %p218
        %p403 = pneg %p215
        %p404 = pneg %p246
        %p405 = pneg %p243
        %s406 = sand.u32 %s233, 1
        %s407 = scalar_lea.sflag [#allocation4], %s406
        %s408 = sand.u32 %s233, 1
        %s409 = smul.addr %s408, 16
        %s410 = scalar_lea.vmem [#allocation10], %s409
        %s411 = smul.u32 2, %s34
        %s412 = smul.u32 2, %s34
        %v414 = vld [vmem:[%s356] sm:$0xff]
        %v415 = vld [vmem:[%s356 + $0x8] sm:$0xff]
        %v416 = vld [vmem:[%s2] sm:$0x1]
        %v418 = vlaneseq
        %v419 = vshrl.u32 %v418, 7
        %v420 = vsub.s32 0, %v419
        %v421 = vrot.slane %v416, %v420
        %v423 = vmul.f32 %v414, %v421
        %v424 = vmul.f32 %v415, %v421
        %v425 = vld [vmem:[%s3] sm:$0x1]
        %v427 = vlaneseq
        %v428 = vshrl.u32 %v427, 7
        %v429 = vsub.s32 0, %v428
        %v430 = vrot.slane %v425, %v429
        %v432 = vadd.f32 %v423, %v430
        %v433 = vadd.f32 %v424, %v430
        %v434 = vld [vmem:[%s365] sm:$0x3]
        %vm437 = vcmask 1040384
        %v438 = vrot.slane %v432, 7
        %v439 = vrot.slane %v433, 7
        %v440 = vsel %vm437, %v438, %v439
        %v444 = vsel %vm437, %v434, %v438
        %v445 = vsel %vm437, %v439, %v434
        %vm448 = vcmask 1046528
        %v449 = vrot.slane %v444, 1
        %v450 = vrot.slane %v440, 1
        %v451 = vsel %vm448, %v449, %v450
        %v452 = vrot.slane %v445, 1
        %v453 = vsel %vm448, %v450, %v452
        %vm456 = vcmask 1045504
        %v457 = vrot.slane %v444, 2
        %v458 = vrot.slane %v440, 2
        %v459 = vsel %vm456, %v457, %v458
        %v460 = vrot.slane %v445, 2
        %v461 = vsel %vm456, %v458, %v460
        %v464 = vpack.c.bf16 %v440, %v444
        %v465 = vpack.c.bf16 %v453, %v451
        %v466 = vpack.c.bf16 %v461, %v459
        %v467 = vld [vmem:[#allocation7] sm:$0xff]
        %v468 = vld [vmem:[#allocation7 + $0x8] sm:$0xff]
        %v469 = vld [vmem:[#allocation7 + $0x10] sm:$0xff]
        %v470 = vld [vmem:[#allocation7 + $0x18] sm:$0xff]
        %v471 = vld [vmem:[#allocation7 + $0x20] sm:$0xff]
        %v472 = vld [vmem:[#allocation7 + $0x28] sm:$0xff]
        %v473 = vld [vmem:[#allocation7 + $0x30] sm:$0xff]
        %v474 = vld [vmem:[#allocation7 + $0x38] sm:$0xff]
        %v475 = vld [vmem:[#allocation7 + $0x40] sm:$0xff]
        %v476 = vld [vmem:[#allocation7 + $0x48] sm:$0xff]
        %v477 = vld [vmem:[#allocation7 + $0x50] sm:$0xff]
        %v478 = vld [vmem:[#allocation7 + $0x58] sm:$0xff]
        %v479 = vld [vmem:[#allocation7 + $0x60] sm:$0xff]
        %v480 = vld [vmem:[#allocation7 + $0x68] sm:$0xff]
        %v481 = vld [vmem:[#allocation7 + $0x70] sm:$0xff]
        %v482 = vld [vmem:[#allocation7 + $0x78] sm:$0xff]
        %v483 = vld [vmem:[#allocation7 + $0x80] sm:$0xff]
        %v484 = vld [vmem:[#allocation7 + $0x88] sm:$0xff]
        %v485 = vld [vmem:[#allocation7 + $0x90] sm:$0xff]
        %v486 = vld [vmem:[#allocation7 + $0x98] sm:$0xff]
        %v487 = vld [vmem:[#allocation7 + $0xa0] sm:$0xff]
        %v488 = vld [vmem:[#allocation7 + $0xa8] sm:$0xff]
        %v489 = vld [vmem:[#allocation7 + $0xb0] sm:$0xff]
        %v490 = vld [vmem:[#allocation7 + $0xb8] sm:$0xff]
        %v491 = vld [vmem:[#allocation7 + $0xc0] sm:$0xff]
        %v492 = vld [vmem:[#allocation7 + $0xc8] sm:$0xff]
        %v493 = vld [vmem:[#allocation7 + $0xd0] sm:$0xff]
        %v494 = vld [vmem:[#allocation7 + $0xd8] sm:$0xff]
        %v495 = vld [vmem:[#allocation7 + $0xe0] sm:$0xff]
        %v496 = vld [vmem:[#allocation7 + $0xe8] sm:$0xff]
        %v497 = vld [vmem:[#allocation7 + $0xf0] sm:$0xff]
        %v498 = vld [vmem:[#allocation7 + $0xf8] sm:$0xff]
        %v499 = vld [vmem:[#allocation7 + $0x100] sm:$0xff]
        %v500 = vld [vmem:[#allocation7 + $0x108] sm:$0xff]
        %v501 = vld [vmem:[#allocation7 + $0x110] sm:$0xff]
        %v502 = vld [vmem:[#allocation7 + $0x118] sm:$0xff]
        %v503 = vld [vmem:[#allocation7 + $0x120] sm:$0xff]
        %v504 = vld [vmem:[#allocation7 + $0x128] sm:$0xff]
        %v505 = vld [vmem:[#allocation7 + $0x130] sm:$0xff]
        %v506 = vld [vmem:[#allocation7 + $0x138] sm:$0xff]
        %v507 = vld [vmem:[#allocation7 + $0x140] sm:$0xff]
        %v508 = vld [vmem:[#allocation7 + $0x148] sm:$0xff]
        %v509 = vld [vmem:[#allocation7 + $0x150] sm:$0xff]
        %v510 = vld [vmem:[#allocation7 + $0x158] sm:$0xff]
        %v511 = vld [vmem:[#allocation7 + $0x160] sm:$0xff]
        %v512 = vld [vmem:[#allocation7 + $0x168] sm:$0xff]
        %v513 = vld [vmem:[#allocation7 + $0x170] sm:$0xff]
        %v514 = vld [vmem:[#allocation7 + $0x178] sm:$0xff]
        %v515 = vld [vmem:[%s5] sm:$0x3]
        %v517 = vlaneseq
        %v518 = vshrl.u32 %v517, 7
        %v519 = vsub.s32 0, %v518
        %v520 = vrot.slane %v515, %v519
        %v521 = vlaneseq
        %v522 = vshrl.u32 %v521, 7
        %v523 = vsub.s32 1, %v522
        %v524 = vrot.slane %v515, %v523
        %v575 = vunpack.c.l.b16 %v467
        %v576 = vunpack.c.h.b16 %v467
        %v577 = vunpack.c.l.b16 %v468
        %v578 = vunpack.c.h.b16 %v468
        %v579 = vunpack.c.l.b16 %v469
        %v580 = vunpack.c.h.b16 %v469
        %v581 = vunpack.c.l.b16 %v470
        %v582 = vunpack.c.h.b16 %v470
        %v583 = vunpack.c.l.b16 %v471
        %v584 = vunpack.c.h.b16 %v471
        %v585 = vunpack.c.l.b16 %v472
        %v586 = vunpack.c.h.b16 %v472
        %v587 = vunpack.c.l.b16 %v473
        %v588 = vunpack.c.h.b16 %v473
        %v589 = vunpack.c.l.b16 %v474
        %v590 = vunpack.c.h.b16 %v474
        %v591 = vunpack.c.l.b16 %v475
        %v592 = vunpack.c.h.b16 %v475
        %v593 = vunpack.c.l.b16 %v476
        %v594 = vunpack.c.h.b16 %v476
        %v595 = vunpack.c.l.b16 %v477
        %v596 = vunpack.c.h.b16 %v477
        %v597 = vunpack.c.l.b16 %v478
        %v598 = vunpack.c.h.b16 %v478
        %v599 = vunpack.c.l.b16 %v479
        %v600 = vunpack.c.h.b16 %v479
        %v601 = vunpack.c.l.b16 %v480
        %v602 = vunpack.c.h.b16 %v480
        %v603 = vunpack.c.l.b16 %v481
        %v604 = vunpack.c.h.b16 %v481
        %v605 = vunpack.c.l.b16 %v482
        %v606 = vunpack.c.h.b16 %v482
        %v607 = vunpack.c.l.b16 %v483
        %v608 = vunpack.c.h.b16 %v483
        %v609 = vunpack.c.l.b16 %v484
        %v610 = vunpack.c.h.b16 %v484
        %v611 = vunpack.c.l.b16 %v485
        %v612 = vunpack.c.h.b16 %v485
        %v613 = vunpack.c.l.b16 %v486
        %v614 = vunpack.c.h.b16 %v486
        %v615 = vunpack.c.l.b16 %v487
        %v616 = vunpack.c.h.b16 %v487
        %v617 = vunpack.c.l.b16 %v488
        %v618 = vunpack.c.h.b16 %v488
        %v619 = vunpack.c.l.b16 %v489
        %v620 = vunpack.c.h.b16 %v489
        %v621 = vunpack.c.l.b16 %v490
        %v622 = vunpack.c.h.b16 %v490
        %v623 = vunpack.c.l.b16 %v491
        %v624 = vunpack.c.h.b16 %v491
        %v625 = vunpack.c.l.b16 %v492
        %v626 = vunpack.c.h.b16 %v492
        %v627 = vunpack.c.l.b16 %v493
        %v628 = vunpack.c.h.b16 %v493
        %v629 = vunpack.c.l.b16 %v494
        %v630 = vunpack.c.h.b16 %v494
        %v631 = vunpack.c.l.b16 %v495
        %v632 = vunpack.c.h.b16 %v495
        %v633 = vunpack.c.l.b16 %v496
        %v634 = vunpack.c.h.b16 %v496
        %v635 = vunpack.c.l.b16 %v497
        %v636 = vunpack.c.h.b16 %v497
        %v637 = vunpack.c.l.b16 %v498
        %v638 = vunpack.c.h.b16 %v498
        %v639 = vunpack.c.l.b16 %v499
        %v640 = vunpack.c.h.b16 %v499
        %v641 = vunpack.c.l.b16 %v500
        %v642 = vunpack.c.h.b16 %v500
        %v643 = vunpack.c.l.b16 %v501
        %v644 = vunpack.c.h.b16 %v501
        %v645 = vunpack.c.l.b16 %v502
        %v646 = vunpack.c.h.b16 %v502
        %v647 = vunpack.c.l.b16 %v503
        %v648 = vunpack.c.h.b16 %v503
        %v649 = vunpack.c.l.b16 %v504
        %v650 = vunpack.c.h.b16 %v504
        %v651 = vunpack.c.l.b16 %v505
        %v652 = vunpack.c.h.b16 %v505
        %v653 = vunpack.c.l.b16 %v506
        %v654 = vunpack.c.h.b16 %v506
        %v655 = vunpack.c.l.b16 %v507
        %v656 = vunpack.c.h.b16 %v507
        %v657 = vunpack.c.l.b16 %v508
        %v658 = vunpack.c.h.b16 %v508
        %v659 = vunpack.c.l.b16 %v509
        %v660 = vunpack.c.h.b16 %v509
        %v661 = vunpack.c.l.b16 %v510
        %v662 = vunpack.c.h.b16 %v510
        %v663 = vunpack.c.l.b16 %v511
        %v664 = vunpack.c.h.b16 %v511
        %v665 = vunpack.c.l.b16 %v512
        %v666 = vunpack.c.h.b16 %v512
        %v667 = vunpack.c.l.b16 %v513
        %v668 = vunpack.c.h.b16 %v513
        %v669 = vunpack.c.l.b16 %v514
        %v670 = vunpack.c.h.b16 %v514
        %v671 = vpack.c.b16 %v577, %v575
        %v672 = vpack.c.b16 %v578, %v576
        %v673 = vpack.c.b16 %v581, %v579
        %v674 = vpack.c.b16 %v582, %v580
        %v675 = vpack.c.b16 %v585, %v583
        %v676 = vpack.c.b16 %v586, %v584
        %v677 = vpack.c.b16 %v589, %v587
        %v678 = vpack.c.b16 %v590, %v588
        %v679 = vpack.c.b16 %v593, %v591
        %v680 = vpack.c.b16 %v594, %v592
        %v681 = vpack.c.b16 %v597, %v595
        %v682 = vpack.c.b16 %v598, %v596
        %v683 = vpack.c.b16 %v601, %v599
        %v684 = vpack.c.b16 %v602, %v600
        %v685 = vpack.c.b16 %v605, %v603
        %v686 = vpack.c.b16 %v606, %v604
        %v687 = vpack.c.b16 %v609, %v607
        %v688 = vpack.c.b16 %v610, %v608
        %v689 = vpack.c.b16 %v613, %v611
        %v690 = vpack.c.b16 %v614, %v612
        %v691 = vpack.c.b16 %v617, %v615
        %v692 = vpack.c.b16 %v618, %v616
        %v693 = vpack.c.b16 %v621, %v619
        %v694 = vpack.c.b16 %v622, %v620
        %v695 = vpack.c.b16 %v625, %v623
        %v696 = vpack.c.b16 %v626, %v624
        %v697 = vpack.c.b16 %v629, %v627
        %v698 = vpack.c.b16 %v630, %v628
        %v699 = vpack.c.b16 %v633, %v631
        %v700 = vpack.c.b16 %v634, %v632
        %v701 = vpack.c.b16 %v637, %v635
        %v702 = vpack.c.b16 %v638, %v636
        %v703 = vpack.c.b16 %v641, %v639
        %v704 = vpack.c.b16 %v642, %v640
        %v705 = vpack.c.b16 %v645, %v643
        %v706 = vpack.c.b16 %v646, %v644
        %v707 = vpack.c.b16 %v649, %v647
        %v708 = vpack.c.b16 %v650, %v648
        %v709 = vpack.c.b16 %v653, %v651
        %v710 = vpack.c.b16 %v654, %v652
        %v711 = vpack.c.b16 %v657, %v655
        %v712 = vpack.c.b16 %v658, %v656
        %v713 = vpack.c.b16 %v661, %v659
        %v714 = vpack.c.b16 %v662, %v660
        %v715 = vpack.c.b16 %v665, %v663
        %v716 = vpack.c.b16 %v666, %v664
        %v717 = vpack.c.b16 %v669, %v667
        %v718 = vpack.c.b16 %v670, %v668
        %767 = vmatprep.subr.bf16.mxu0 %v672
        %768 = vmatpush1.bf16.msra.mxu0 %v671
        %769 = vmatprep.subr.bf16.mxu0 %v674
        %770 = vmatpush1.bf16.msra.mxu0 %v673
        %771 = vmatprep.subr.bf16.mxu0 %v676
        %772 = vmatpush1.bf16.msra.mxu0 %v675
        %773 = vmatprep.subr.bf16.mxu0 %v678
        %774 = vmatpush1.bf16.msra.mxu0 %v677
        %775 = vmatprep.subr.bf16.mxu0 %v680
        %776 = vmatpush1.bf16.msra.mxu0 %v679
        %777 = vmatprep.subr.bf16.mxu0 %v682
        %778 = vmatpush1.bf16.msra.mxu0 %v681
        %779 = vmatprep.subr.bf16.mxu0 %v684
        %780 = vmatpush1.bf16.msra.mxu0 %v683
        %781 = vmatprep.subr.bf16.mxu0 %v686
        %782 = vmatpush1.bf16.msra.mxu0 %v685
        %783 = vmatprep.subr.bf16.mxu0 %v688
        %784 = vmatpush1.bf16.msra.mxu0 %v687
        %785 = vmatprep.subr.bf16.mxu0 %v690
        %786 = vmatpush1.bf16.msra.mxu0 %v689
        %787 = vmatprep.subr.bf16.mxu0 %v692
        %788 = vmatpush1.bf16.msra.mxu0 %v691
        %789 = vmatprep.subr.bf16.mxu0 %v694
        %790 = vmatpush1.bf16.msra.mxu0 %v693
        %791 = vmatprep.subr.bf16.mxu0 %v696
        %792 = vmatpush1.bf16.msra.mxu0 %v695
        %793 = vmatprep.subr.bf16.mxu0 %v698
        %794 = vmatpush1.bf16.msra.mxu0 %v697
        %795 = vmatprep.subr.bf16.mxu0 %v700
        %796 = vmatpush1.bf16.msra.mxu0 %v699
        %797 = vmatprep.subr.bf16.mxu0 %v702
        %798 = vmatpush1.bf16.msra.mxu0 %v701
        %799 = vmatprep.mubr.bf16.mxu0 %v465
        %800 = vmatmul.mubr.bf16.gmra.mrb[0].mxu0 %v464
        %v801 = vpop.f32.mrb[0].mxu0
        %v802 = vadd.f32 %v520, %v801
        %v803 = vpop.f32.mrb[0].mxu0
        %v804 = vadd.f32 %v524, %v803
        %v805 = vpop.f32.mrb[0].mxu0
        %v806 = vadd.f32 %v520, %v805
        %v807 = vpop.f32.mrb[0].mxu0
        %v808 = vadd.f32 %v524, %v807
        %809 = vdwg.mxu0
        %810 = vmatprep.subr.bf16.mxu0 %v704
        %811 = vmatpush1.bf16.msra.mxu0 %v703
        %812 = vmatprep.subr.bf16.mxu0 %v706
        %813 = vmatpush1.bf16.msra.mxu0 %v705
        %814 = vmatprep.subr.bf16.mxu0 %v708
        %815 = vmatpush1.bf16.msra.mxu0 %v707
        %816 = vmatprep.subr.bf16.mxu0 %v710
        %817 = vmatpush1.bf16.msra.mxu0 %v709
        %818 = vmatprep.subr.bf16.mxu0 %v712
        %819 = vmatpush1.bf16.msra.mxu0 %v711
        %820 = vmatprep.subr.bf16.mxu0 %v714
        %821 = vmatpush1.bf16.msra.mxu0 %v713
        %822 = vmatprep.subr.bf16.mxu0 %v716
        %823 = vmatpush1.bf16.msra.mxu0 %v715
        %824 = vmatprep.subr.bf16.mxu0 %v718
        %825 = vmatpush1.bf16.msra.mxu0 %v717
        %826 = vmatprep.subr.bf16.mxu0 0
        %827 = vmatpush1.bf16.msra.mxu0 0
        %828 = vmatprep.subr.bf16.mxu0 0
        %829 = vmatpush1.bf16.msra.mxu0 0
        %830 = vmatprep.subr.bf16.mxu0 0
        %831 = vmatpush1.bf16.msra.mxu0 0
        %832 = vmatprep.subr.bf16.mxu0 0
        %833 = vmatpush1.bf16.msra.mxu0 0
        %834 = vmatprep.subr.bf16.mxu0 0
        %835 = vmatpush1.bf16.msra.mxu0 0
        %836 = vmatprep.subr.bf16.mxu0 0
        %837 = vmatpush1.bf16.msra.mxu0 0
        %838 = vmatprep.subr.bf16.mxu0 0
        %839 = vmatpush1.bf16.msra.mxu0 0
        %840 = vmatprep.subr.bf16.mxu0 0
        %841 = vmatpush1.bf16.msra.mxu0 0
        %842 = vmatprep.mubr.bf16.mxu0 0
        %843 = vmatmul.mubr.bf16.gmra.mrb[0].mxu0 %v466
        %v844 = vpop.f32.mrb[0].mxu0
        %v845 = vadd.f32 %v802, %v844
        %v846 = vpop.f32.mrb[0].mxu0
        %v847 = vadd.f32 %v804, %v846
        %v848 = vpop.f32.mrb[0].mxu0
        %v849 = vadd.f32 %v806, %v848
        %v850 = vpop.f32.mrb[0].mxu0
        %v851 = vadd.f32 %v808, %v850
        %852 = vdwg.mxu0
        %v853 = vsub.f32 0.0, %v847
        %v854 = vsub.f32 0.0, %v851
        %v855 = vmul.f32 %v853, 1.442695
        %v856 = vpow.pop %v855
        %v857 = vmul.f32 %v854, 1.442695
        %v858 = vpow.pop %v857
        %v859 = vadd.f32 %v856, 1.0
        %v860 = vadd.f32 %v858, 1.0
        %v861 = vrcp.pop %v859
        %v862 = vrcp.pop %v860
        %v863 = vmul.f32 %v845, %v861
        %v864 = vmul.f32 %v849, %v862
        %v865 = vpack.c.bf16 %v864, %v863
        %v866 = vld [vmem:[#allocation8] sm:$0xf]
        %v867 = vld [vmem:[#allocation8 + $0x4] sm:$0xf]
        %v868 = vld [vmem:[#allocation8 + $0x8] sm:$0xf]
        %v869 = vld [vmem:[#allocation8 + $0xc] sm:$0xf]
        %v870 = vld [vmem:[#allocation8 + $0x10] sm:$0xf]
        %v871 = vld [vmem:[#allocation8 + $0x14] sm:$0xf]
        %v872 = vld [vmem:[#allocation8 + $0x18] sm:$0xf]
        %v873 = vld [vmem:[#allocation8 + $0x1c] sm:$0xf]
        %v874 = vld [vmem:[#allocation8 + $0x20] sm:$0xf]
        %v875 = vld [vmem:[#allocation8 + $0x24] sm:$0xf]
        %v876 = vld [vmem:[#allocation8 + $0x28] sm:$0xf]
        %v877 = vld [vmem:[#allocation8 + $0x2c] sm:$0xf]
        %v878 = vld [vmem:[#allocation8 + $0x30] sm:$0xf]
        %v879 = vld [vmem:[#allocation8 + $0x34] sm:$0xf]
        %v880 = vld [vmem:[#allocation8 + $0x38] sm:$0xf]
        %v881 = vld [vmem:[#allocation8 + $0x3c] sm:$0xf]
        %v882 = vld [vmem:[%s7] sm:$0x1]
        %v884 = vlaneseq
        %v885 = vshrl.u32 %v884, 7
        %v886 = vsub.s32 0, %v885
        %v887 = vrot.slane %v882, %v886
        %v905 = vunpack.c.l.b16 %v866
        %v906 = vunpack.c.l.b16 %v867
        %v907 = vunpack.c.l.b16 %v868
        %v908 = vunpack.c.l.b16 %v869
        %v909 = vunpack.c.l.b16 %v870
        %v910 = vunpack.c.l.b16 %v871
        %v911 = vunpack.c.l.b16 %v872
        %v912 = vunpack.c.l.b16 %v873
        %v913 = vunpack.c.l.b16 %v874
        %v914 = vunpack.c.l.b16 %v875
        %v915 = vunpack.c.l.b16 %v876
        %v916 = vunpack.c.l.b16 %v877
        %v917 = vunpack.c.l.b16 %v878
        %v918 = vunpack.c.l.b16 %v879
        %v919 = vunpack.c.l.b16 %v880
        %v920 = vunpack.c.l.b16 %v881
        %v921 = vpack.c.b16 %v906, %v905
        %v922 = vpack.c.b16 %v908, %v907
        %v923 = vpack.c.b16 %v910, %v909
        %v924 = vpack.c.b16 %v912, %v911
        %v925 = vpack.c.b16 %v914, %v913
        %v926 = vpack.c.b16 %v916, %v915
        %v927 = vpack.c.b16 %v918, %v917
        %v928 = vpack.c.b16 %v920, %v919
        %937 = vmatprep.subr.bf16.mxu0 0
        %938 = vmatpush1.bf16.msra.mxu0 %v921
        %939 = vmatprep.subr.bf16.mxu0 0
        %940 = vmatpush1.bf16.msra.mxu0 %v922
        %941 = vmatprep.subr.bf16.mxu0 0
        %942 = vmatpush1.bf16.msra.mxu0 %v923
        %943 = vmatprep.subr.bf16.mxu0 0
        %944 = vmatpush1.bf16.msra.mxu0 %v924
        %945 = vmatprep.subr.bf16.mxu0 0
        %946 = vmatpush1.bf16.msra.mxu0 %v925
        %947 = vmatprep.subr.bf16.mxu0 0
        %948 = vmatpush1.bf16.msra.mxu0 %v926
        %949 = vmatprep.subr.bf16.mxu0 0
        %950 = vmatpush1.bf16.msra.mxu0 %v927
        %951 = vmatprep.subr.bf16.mxu0 0
        %952 = vmatpush1.bf16.msra.mxu0 %v928
        %953 = vmatprep.subr.bf16.mxu0 0
        %954 = vmatpush1.bf16.msra.mxu0 0
        %955 = vmatprep.subr.bf16.mxu0 0
        %956 = vmatpush1.bf16.msra.mxu0 0
        %957 = vmatprep.subr.bf16.mxu0 0
        %958 = vmatpush1.bf16.msra.mxu0 0
        %959 = vmatprep.subr.bf16.mxu0 0
        %960 = vmatpush1.bf16.msra.mxu0 0
        %961 = vmatprep.subr.bf16.mxu0 0
        %962 = vmatpush1.bf16.msra.mxu0 0
        %963 = vmatprep.subr.bf16.mxu0 0
        %964 = vmatpush1.bf16.msra.mxu0 0
        %965 = vmatprep.subr.bf16.mxu0 0
        %966 = vmatpush1.bf16.msra.mxu0 0
        %967 = vmatprep.subr.bf16.mxu0 0
        %968 = vmatpush1.bf16.msra.mxu0 0
        %969 = vmatprep.mubr.bf16.mxu0 0
        %970 = vmatmul.mubr.bf16.gmra.mrb[0].mxu0 %v865
        %v971 = vpop.f32.mrb[0].mxu0
        %v972 = vadd.f32 %v887, %v971
        %v973 = vpop.f32.mrb[0].mxu0
        %v974 = vpop.f32.mrb[0].mxu0
        %v975 = vadd.f32 %v887, %v974
        %v976 = vpop.f32.mrb[0].mxu0
        %977 = vdwg.mxu0
        %v978 = vadd.f32 %v414, %v972
        %v979 = vadd.f32 %v415, %v975
        %980 = vst [vmem:[%s410] sm:$0xff] %v978
        %981 = vst [vmem:[%s410 + $0x8] sm:$0xff] %v979
        %s982 = sand.u32 %s233, 1
        %s983 = scalar_lea.sflag [#allocation4], %s982
        %s984 = sand.u32 %s233, 1
        %s985 = smul.addr %s984, 16
        %s986 = scalar_lea.vmem [#allocation10], %s985
        // Predicated region
        $region69: #{tpu_custom_call.1} parent=51 // pred_check
          %p987 = pneg %p243
        $region70: #{tpu_custom_call.1} parent=51 // pred_check_branch
          %989 = sbr.rel (%p987) target = $region72
        $region71: #{tpu_custom_call.1} parent=51 // pred_region
          %s990 = smul.u32 2, %s34
          %s992 = ssub.s32 256, 256
          %993 = vsyncadd %s983, %s992
          %s994 = smul.addr %s33, 2
          %s995 = sadd.s32 %s990, %s994
          %s996 = smul.addr %s995, 128
          %s997 = scalar_lea.hbm %s8, %s996
          %s998 = sshll.u32 %s986, 4
          %s999 = int_to_ptr.vmem [resolvable:$true] %s998
          %1004 = dma.vmem_to_hbm [thread:$0]  %s999, 256, %s997, %s983, 128, 128, 8
        $region72: #{tpu_custom_call.1} parent=51 // pred_fallthru
          _
      $region52: #{tpu_custom_call.1} parent=5 // pred_fallthru
        _
      %p1005 = scmp.le.s32.totalorder 2, %s24
      // Predicated region
      $region73: #{tpu_custom_call.1} parent=5 // pred_check
        %p1006 = pneg %p1005
      $region74: #{tpu_custom_call.1} parent=5 // pred_check_branch
        %1008 = sbr.rel (%p1006) target = $region76
      $region75: #{tpu_custom_call.1} parent=5 // pred_region
        %s1009 = ssub.s32 %s24, 2
        // Predicated region
        $region77: #{tpu_custom_call.1} parent=75 // pred_check
          %p1010 = pneg %p249
        $region78: #{tpu_custom_call.1} parent=75 // pred_check_branch
          %1012 = sbr.rel (%p1010) target = $region80
        $region79: #{tpu_custom_call.1} parent=75 // pred_region
          %s1013 = sand.u32 %s234, 1
          %s1014 = scalar_lea.sflag [#allocation4], %s1013
          %s1015 = sand.u32 %s234, 1
          %s1016 = smul.addr %s1015, 16
          %s1017 = scalar_lea.vmem [#allocation10], %s1016
          %1018 = dma.done %s1014, 256
        $region80: #{tpu_custom_call.1} parent=75 // pred_fallthru
          _
      $region76: #{tpu_custom_call.1} parent=5 // pred_fallthru
        _
    $region6: #{tpu_custom_call.1} parent=1 // loop_footer
      %s28 = sadd.s32 1, %s24
    $region7: #{tpu_custom_call.1} parent=1 // loop_footer_branch
      %23 = sbr.rel target = $region3
    $region8: #{tpu_custom_call.1} parent=1 // loop_exit
      _
    %1019 = vsyncpa [#allocation3], 1
    %s1020 = scalar_lea.sflag [#allocation3], 1
    %1021 = vsyncpa %s1020, 1
    %1022 = vsyncpa [#allocation6], 1
    %s1023 = scalar_lea.sflag [#allocation6], 1
    %1024 = vsyncpa %s1023, 1
    %1025 = vsyncpa [#allocation9], 1
    %1026 = vsyncpa [#allocation4], 1
    %s1027 = scalar_lea.sflag [#allocation4], 1
    %1028 = vsyncpa %s1027, 1

// kernel: tpu_custom_call.1
$region0: #{tpu_custom_call.1}
  #allocation0 [shape = 'u32[]', space=smem, size = 0x4, offset = 0x4, fixed_abs, tag = 'smem constant byte address 0x4 - core index']
  #allocation1 [shape = 'u32[144,128]{1,0:T(1,128)}', space=vmem, size = 0x12000, scoped, tag = 'internal scratch']
  %s0 = inlined_call_operand.hbm [shape: f32[2,16,128], index: 0, kind: input, shape index: {}]
  %s1 = inlined_call_operand.hbm [shape: f32[2,1,2,128], index: 1, kind: input, shape index: {}]
  %s2 = inlined_call_operand.vmem [shape: f32[1,128], index: 2, kind: input, shape index: {}]
  %s3 = inlined_call_operand.vmem [shape: f32[1,128], index: 3, kind: input, shape index: {}]
  %s4 = inlined_call_operand.hbm [shape: bf16[384,256], index: 4, kind: input, shape index: {}]
  %s5 = inlined_call_operand.vmem [shape: f32[1,256], index: 5, kind: input, shape index: {}]
  %s6 = inlined_call_operand.hbm [shape: bf16[128,128], index: 6, kind: input, shape index: {}]
  %s7 = inlined_call_operand.vmem [shape: f32[1,128], index: 7, kind: input, shape index: {}]
  %s8 = inlined_call_operand.hbm [shape: f32[2,16,128], index: 8, kind: output, shape index: {}]
  %s9 = sld [smem:[#allocation0]]
  $region81: #{tpu_custom_call.1} parent=0
    _
  %s11 = ssub.s32 1, %s9
  %s12 = scalar_select 0, %s11, %s9
  $region1: #{tpu_custom_call.1} parent=0
    #allocation2 [shape = 'u8[16384]{0}', space=vmem, size = 0x4000, scoped, tag = 'input window, operand 0']
    #allocation3 [shape = 's32[2]{0}', space=sflag, size = 0x8, scoped, tag = 'scoped memory for tpu_custom_call.1']
    #allocation4 [shape = 's32[2]{0}', space=sflag, size = 0x8, scoped, tag = 'scoped memory for tpu_custom_call.1']
    #allocation5 [shape = 'u8[2048]{0}', space=vmem, size = 0x800, scoped, tag = 'input window, operand 1']
    #allocation6 [shape = 's32[2]{0}', space=sflag, size = 0x8, scoped, tag = 'scoped memory for tpu_custom_call.1']
    #allocation7 [shape = 'u8[196608]{0}', space=vmem, size = 0x30000, scoped, tag = 'input window, operand 4, single buffered']
    #allocation8 [shape = 'u8[32768]{0}', space=vmem, size = 0x8000, scoped, tag = 'input window, operand 6, single buffered']
    #allocation9 [shape = 's32[1]{0}', space=sflag, size = 0x4, scoped, tag = 'scoped memory for tpu_custom_call.1']
    #allocation10 [shape = 'u8[16384]{0}', space=vmem, size = 0x4000, scoped, tag = 'output window, operand 0']
    %13 = vsyncpa [#allocation3], 0
    %s14 = scalar_lea.sflag [#allocation3], 1
    %15 = vsyncpa %s14, 0
    %16 = vsyncpa [#allocation6], 0
    %s17 = scalar_lea.sflag [#allocation6], 1
    %18 = vsyncpa %s17, 0
    %19 = vsyncpa [#allocation9], 0
    %20 = vsyncpa [#allocation4], 0
    %s21 = scalar_lea.sflag [#allocation4], 1
    %22 = vsyncpa %s21, 0
    loop: start=0, step=1, limit=4
    $region2: #{tpu_custom_call.1} parent=1 // loop_pre_header
      _
    $region3: #{tpu_custom_call.1} parent=1 // loop_header
      %s24 = sphi 0, %s28
      %p25 = scmp.ge.s32.totalorder %s24, 4
      %s31 = sphi 0, %s43
      %s32 = sphi 0, %s39
      %s33 = sphi 0, %s31
      %s34 = sphi 0, %s32
      %s35 = sphi 0, %s33
      %s36 = sphi 0, %s34
      %s48 = sphi 0, %s50
      %s51 = sphi 0, %s48
      %s52 = sphi 0, %s51
      %s68 = sphi 0, %s52
      %s76 = sphi 0, %s78
      %s79 = sphi 0, %s76
      %s80 = sphi 0, %s79
      %s96 = sphi 0, %s80
      %s100 = sphi 0, %s100
      %s102 = sphi 0, %s100
      %s103 = sphi 0, %s102
      %s117 = sphi 0, %s103
      %s121 = sphi 0, %s121
      %s123 = sphi 0, %s121
      %s124 = sphi 0, %s123
      %s138 = sphi 0, %s124
      %s142 = sphi 0, %s142
      %s144 = sphi 0, %s142
      %s145 = sphi 0, %s144
      %s159 = sphi 0, %s145
      %s163 = sphi 0, %s163
      %s165 = sphi 0, %s163
      %s166 = sphi 0, %s165
      %s180 = sphi 0, %s166
      %s184 = sphi 0, %s184
      %s186 = sphi 0, %s184
      %s187 = sphi 0, %s186
      %s201 = sphi 0, %s187
      %s205 = sphi 0, %s205
      %s207 = sphi 0, %s205
      %s208 = sphi 0, %s207
      %s222 = sphi 0, %s208
      %s230 = sphi 0, %s232
      %s233 = sphi 0, %s230
      %s234 = sphi 0, %s233
      %s250 = sphi 0, %s234
    $region4: #{tpu_custom_call.1} parent=1 // loop_header_branch
      %27 = sbr.rel (%p25) target = $region8
    $region5: #{tpu_custom_call.1} parent=1 // loop_body
      %s29 = ssub.s32 %s24, 1
      %s30 = ssub.s32 %s24, 2
      %s37 = sadd.s32 1, %s32
      %p38 = scmp.ge.s32.totalorder %s37, 1
      %s39 = scalar_select %p38, 0, %s37
      %s40 = sadd.s32 1, %s31
      %s41 = scalar_select %p38, %s40, %s31
      %p42 = scmp.ge.s32.totalorder %s41, 2
      %s43 = scalar_select %p42, 0, %s41
      %s44 = ssub.s32 %s31, %s43
      %s45 = ssub.s32 %s32, %s39
      %s46 = sor.u32 %s44, %s45
      %p47 = scmp.eq.s32.totalorder %s46, 0
      %s49 = sadd.s32 %s48, 1
      %s50 = scalar_select %p47, %s48, %s49
      %p53 = pneg %p47
      %p54 = scmp.eq.s32.totalorder %s24, 1
      %p55 = por %p53, %p54
      %p56 = scmp.ne.s32.totalorder %s48, %s51
      %p57 = scmp.eq.s32.totalorder %s24, 0
      %p58 = por %p56, %p57
      %p59 = scmp.ne.s32.totalorder %s48, %s51
      %p60 = scmp.eq.s32.totalorder %s29, 1
      %p61 = por %p59, %p60
      %p62 = scmp.ne.s32.totalorder %s51, %s52
      %p63 = scmp.eq.s32.totalorder %s29, 0
      %p64 = por %p62, %p63
      %p65 = scmp.ne.s32.totalorder %s51, %s52
      %p66 = scmp.eq.s32.totalorder %s30, 1
      %p67 = por %p65, %p66
      %p69 = scmp.ne.s32.totalorder %s52, %s68
      %p70 = scmp.eq.s32.totalorder %s30, 0
      %p71 = por %p69, %p70
      %s72 = ssub.s32 %s31, %s43
      %s73 = ssub.s32 %s32, %s39
      %s74 = sor.u32 %s72, %s73
      %p75 = scmp.eq.s32.totalorder %s74, 0
      %s77 = sadd.s32 %s76, 1
      %s78 = scalar_select %p75, %s76, %s77
      %p81 = pneg %p75
      %p82 = scmp.eq.s32.totalorder %s24, 1
      %p83 = por %p81, %p82
      %p84 = scmp.ne.s32.totalorder %s76, %s79
      %p85 = scmp.eq.s32.totalorder %s24, 0
      %p86 = por %p84, %p85
      %p87 = scmp.ne.s32.totalorder %s76, %s79
      %p88 = scmp.eq.s32.totalorder %s29, 1
      %p89 = por %p87, %p88
      %p90 = scmp.ne.s32.totalorder %s79, %s80
      %p91 = scmp.eq.s32.totalorder %s29, 0
      %p92 = por %p90, %p91
      %p93 = scmp.ne.s32.totalorder %s79, %s80
      %p94 = scmp.eq.s32.totalorder %s30, 1
      %p95 = por %p93, %p94
      %p97 = scmp.ne.s32.totalorder %s80, %s96
      %p98 = scmp.eq.s32.totalorder %s30, 0
      %p99 = por %p97, %p98
      %s101 = sadd.s32 %s100, 1
      %p104 = scmp.eq.s32.totalorder %s24, 1
      %p105 = scmp.ne.s32.totalorder %s100, %s102
      %p106 = scmp.eq.s32.totalorder %s24, 0
      %p107 = por %p105, %p106
      %p108 = scmp.ne.s32.totalorder %s100, %s102
      %p109 = scmp.eq.s32.totalorder %s29, 1
      %p110 = por %p108, %p109
      %p111 = scmp.ne.s32.totalorder %s102, %s103
      %p112 = scmp.eq.s32.totalorder %s29, 0
      %p113 = por %p111, %p112
      %p114 = scmp.ne.s32.totalorder %s102, %s103
      %p115 = scmp.eq.s32.totalorder %s30, 1
      %p116 = por %p114, %p115
      %p118 = scmp.ne.s32.totalorder %s103, %s117
      %p119 = scmp.eq.s32.totalorder %s30, 0
      %p120 = por %p118, %p119
      %s122 = sadd.s32 %s121, 1
      %p125 = scmp.eq.s32.totalorder %s24, 1
      %p126 = scmp.ne.s32.totalorder %s121, %s123
      %p127 = scmp.eq.s32.totalorder %s24, 0
      %p128 = por %p126, %p127
      %p129 = scmp.ne.s32.totalorder %s121, %s123
      %p130 = scmp.eq.s32.totalorder %s29, 1
      %p131 = por %p129, %p130
      %p132 = scmp.ne.s32.totalorder %s123, %s124
      %p133 = scmp.eq.s32.totalorder %s29, 0
      %p134 = por %p132, %p133
      %p135 = scmp.ne.s32.totalorder %s123, %s124
      %p136 = scmp.eq.s32.totalorder %s30, 1
      %p137 = por %p135, %p136
      %p139 = scmp.ne.s32.totalorder %s124, %s138
      %p140 = scmp.eq.s32.totalorder %s30, 0
      %p141 = por %p139, %p140
      %s143 = sadd.s32 %s142, 1
      %p146 = scmp.eq.s32.totalorder %s24, 1
      %p147 = scmp.ne.s32.totalorder %s142, %s144
      %p148 = scmp.eq.s32.totalorder %s24, 0
      %p149 = por %p147, %p148
      %p150 = scmp.ne.s32.totalorder %s142, %s144
      %p151 = scmp.eq.s32.totalorder %s29, 1
      %p152 = por %p150, %p151
      %p153 = scmp.ne.s32.totalorder %s144, %s145
      %p154 = scmp.eq.s32.totalorder %s29, 0
      %p155 = por %p153, %p154
      %p156 = scmp.ne.s32.totalorder %s144, %s145
      %p157 = scmp.eq.s32.totalorder %s30, 1
      %p158 = por %p156, %p157
      %p160 = scmp.ne.s32.totalorder %s145, %s159
      %p161 = scmp.eq.s32.totalorder %s30, 0
      %p162 = por %p160, %p161
      %s164 = sadd.s32 %s163, 1
      %p167 = scmp.eq.s32.totalorder %s24, 1
      %p168 = scmp.ne.s32.totalorder %s163, %s165
      %p169 = scmp.eq.s32.totalorder %s24, 0
      %p170 = por %p168, %p169
      %p171 = scmp.ne.s32.totalorder %s163, %s165
      %p172 = scmp.eq.s32.totalorder %s29, 1
      %p173 = por %p171, %p172
      %p174 = scmp.ne.s32.totalorder %s165, %s166
      %p175 = scmp.eq.s32.totalorder %s29, 0
      %p176 = por %p174, %p175
      %p177 = scmp.ne.s32.totalorder %s165, %s166
      %p178 = scmp.eq.s32.totalorder %s30, 1
      %p179 = por %p177, %p178
      %p181 = scmp.ne.s32.totalorder %s166, %s180
      %p182 = scmp.eq.s32.totalorder %s30, 0
      %p183 = por %p181, %p182
      %s185 = sadd.s32 %s184, 1
      %p188 = scmp.eq.s32.totalorder %s24, 1
      %p189 = scmp.ne.s32.totalorder %s184, %s186
      %p190 = scmp.eq.s32.totalorder %s24, 0
      %p191 = por %p189, %p190
      %p192 = scmp.ne.s32.totalorder %s184, %s186
      %p193 = scmp.eq.s32.totalorder %s29, 1
      %p194 = por %p192, %p193
      %p195 = scmp.ne.s32.totalorder %s186, %s187
      %p196 = scmp.eq.s32.totalorder %s29, 0
      %p197 = por %p195, %p196
      %p198 = scmp.ne.s32.totalorder %s186, %s187
      %p199 = scmp.eq.s32.totalorder %s30, 1
      %p200 = por %p198, %p199
      %p202 = scmp.ne.s32.totalorder %s187, %s201
      %p203 = scmp.eq.s32.totalorder %s30, 0
      %p204 = por %p202, %p203
      %s206 = sadd.s32 %s205, 1
      %p209 = scmp.eq.s32.totalorder %s24, 1
      %p210 = scmp.ne.s32.totalorder %s205, %s207
      %p211 = scmp.eq.s32.totalorder %s24, 0
      %p212 = por %p210, %p211
      %p213 = scmp.ne.s32.totalorder %s205, %s207
      %p214 = scmp.eq.s32.totalorder %s29, 1
      %p215 = por %p213, %p214
      %p216 = scmp.ne.s32.totalorder %s207, %s208
      %p217 = scmp.eq.s32.totalorder %s29, 0
      %p218 = por %p216, %p217
      %p219 = scmp.ne.s32.totalorder %s207, %s208
      %p220 = scmp.eq.s32.totalorder %s30, 1
      %p221 = por %p219, %p220
      %p223 = scmp.ne.s32.totalorder %s208, %s222
      %p224 = scmp.eq.s32.totalorder %s30, 0
      %p225 = por %p223, %p224
      %s226 = ssub.s32 %s31, %s43
      %s227 = ssub.s32 %s32, %s39
      %s228 = sor.u32 %s226, %s227
      %p229 = scmp.eq.s32.totalorder %s228, 0
      %s231 = sadd.s32 %s230, 1
      %s232 = scalar_select %p229, %s230, %s231
      %p235 = pneg %p229
      %p236 = scmp.eq.s32.totalorder %s24, 1
      %p237 = por %p235, %p236
      %p238 = scmp.ne.s32.totalorder %s230, %s233
      %p239 = scmp.eq.s32.totalorder %s24, 0
      %p240 = por %p238, %p239
      %p241 = scmp.ne.s32.totalorder %s230, %s233
      %p242 = scmp.eq.s32.totalorder %s29, 1
      %p243 = por %p241, %p242
      %p244 = scmp.ne.s32.totalorder %s233, %s234
      %p245 = scmp.eq.s32.totalorder %s29, 0
      %p246 = por %p244, %p245
      %p247 = scmp.ne.s32.totalorder %s233, %s234
      %p248 = scmp.eq.s32.totalorder %s30, 1
      %p249 = por %p247, %p248
      %p251 = scmp.ne.s32.totalorder %s234, %s250
      %p252 = scmp.eq.s32.totalorder %s30, 0
      %p253 = por %p251, %p252
      %p254 = scmp.le.s32.totalorder 1, %s24
      %p255 = scmp.lt.s32.totalorder %s24, 3
      %p256 = pnand %p254, %p255
      %p257 = pneg %p256
      // Predicated region
      $region9: #{tpu_custom_call.1} parent=5 // pred_check
        _
      $region10: #{tpu_custom_call.1} parent=5 // pred_check_branch
        %259 = sbr.rel (%p256) target = $region12
      $region11: #{tpu_custom_call.1} parent=5 // pred_region
        %s260 = ssub.s32 %s24, 1
        // Predicated region
        $region13: #{tpu_custom_call.1} parent=11 // pred_check
          %p261 = pneg %p113
        $region14: #{tpu_custom_call.1} parent=11 // pred_check_branch
          %263 = sbr.rel (%p261) target = $region16
        $region15: #{tpu_custom_call.1} parent=11 // pred_region
          _
        $region16: #{tpu_custom_call.1} parent=11 // pred_fallthru
          _
        // Predicated region
        $region17: #{tpu_custom_call.1} parent=11 // pred_check
          %p264 = pneg %p134
        $region18: #{tpu_custom_call.1} parent=11 // pred_check_branch
          %266 = sbr.rel (%p264) target = $region20
        $region19: #{tpu_custom_call.1} parent=11 // pred_region
          _
        $region20: #{tpu_custom_call.1} parent=11 // pred_fallthru
          _
        // Predicated region
        $region21: #{tpu_custom_call.1} parent=11 // pred_check
          %p267 = pneg %p155
        $region22: #{tpu_custom_call.1} parent=11 // pred_check_branch
          %269 = sbr.rel (%p267) target = $region24
        $region23: #{tpu_custom_call.1} parent=11 // pred_region
          %s271 = ssub.s32 6144, 6144
          %272 = vsyncadd [#allocation6], %s271
          %s273 = sshll.u32 [#allocation7], 4
          %s274 = int_to_ptr.vmem [resolvable:$true] %s273
          %279 = dma.hbm_to_vmem [thread:$0]  %s4, 6144, %s274, [#allocation6], 128, 128, 8
        $region24: #{tpu_custom_call.1} parent=11 // pred_fallthru
          _
        // Predicated region
        $region25: #{tpu_custom_call.1} parent=11 // pred_check
          %p280 = pneg %p176
        $region26: #{tpu_custom_call.1} parent=11 // pred_check_branch
          %282 = sbr.rel (%p280) target = $region28
        $region27: #{tpu_custom_call.1} parent=11 // pred_region
          _
        $region28: #{tpu_custom_call.1} parent=11 // pred_fallthru
          _
        // Predicated region
        $region29: #{tpu_custom_call.1} parent=11 // pred_check
          %p283 = pneg %p197
        $region30: #{tpu_custom_call.1} parent=11 // pred_check_branch
          %285 = sbr.rel (%p283) target = $region32
        $region31: #{tpu_custom_call.1} parent=11 // pred_region
          %s287 = ssub.s32 1024, 1024
          %288 = vsyncadd [#allocation9], %s287
          %s289 = sshll.u32 [#allocation8], 4
          %s290 = int_to_ptr.vmem [resolvable:$true] %s289
          %295 = dma.hbm_to_vmem [thread:$0]  %s6, 1024, %s290, [#allocation9], 64, 64, 4
        $region32: #{tpu_custom_call.1} parent=11 // pred_fallthru
          _
        // Predicated region
        $region33: #{tpu_custom_call.1} parent=11 // pred_check
          %p296 = pneg %p218
        $region34: #{tpu_custom_call.1} parent=11 // pred_check_branch
          %298 = sbr.rel (%p296) target = $region36
        $region35: #{tpu_custom_call.1} parent=11 // pred_region
          _
        $region36: #{tpu_custom_call.1} parent=11 // pred_fallthru
          _
      $region12: #{tpu_custom_call.1} parent=5 // pred_fallthru
        _
      %p299 = scmp.lt.s32.totalorder %s24, 2
      // Predicated region
      $region37: #{tpu_custom_call.1} parent=5 // pred_check
        %p300 = pneg %p299
      $region38: #{tpu_custom_call.1} parent=5 // pred_check_branch
        %302 = sbr.rel (%p300) target = $region40
      $region39: #{tpu_custom_call.1} parent=5 // pred_region
        // Predicated region
        $region41: #{tpu_custom_call.1} parent=39 // pred_check
          %p303 = pneg %p58
        $region42: #{tpu_custom_call.1} parent=39 // pred_check_branch
          %305 = sbr.rel (%p303) target = $region44
        $region43: #{tpu_custom_call.1} parent=39 // pred_region
          %s306 = sand.u32 %s48, 1
          %s307 = scalar_lea.sflag [#allocation3], %s306
          %s308 = sand.u32 %s48, 1
          %s309 = smul.addr %s308, 16
          %s310 = scalar_lea.vmem [#allocation2], %s309
          %s311 = smul.u32 2, %s32
          %s313 = ssub.s32 256, 256
          %314 = vsyncadd %s307, %s313
          %s315 = smul.addr %s31, 2
          %s316 = sadd.s32 %s311, %s315
          %s317 = smul.addr %s316, 128
          %s318 = scalar_lea.hbm %s0, %s317
          %s319 = sshll.u32 %s310, 4
          %s320 = int_to_ptr.vmem [resolvable:$true] %s319
          %325 = dma.hbm_to_vmem [thread:$0]  %s318, 256, %s320, %s307, 128, 128, 8
        $region44: #{tpu_custom_call.1} parent=39 // pred_fallthru
          _
        // Predicated region
        $region45: #{tpu_custom_call.1} parent=39 // pred_check
          %p326 = pneg %p86
        $region46: #{tpu_custom_call.1} parent=39 // pred_check_branch
          %328 = sbr.rel (%p326) target = $region48
        $region47: #{tpu_custom_call.1} parent=39 // pred_region
          %s329 = sand.u32 %s24, 1
          %s330 = scalar_lea.sflag [#allocation6], %s329
          %s331 = sand.u32 %s76, 1
          %s332 = smul.addr %s331, 2
          %s333 = scalar_lea.vmem [#allocation5], %s332
          %s335 = ssub.s32 32, 32
          %336 = vsyncadd %s330, %s335
          %s337 = sadd.s32 %s32, %s31
          %s338 = smul.addr %s337, 32
          %s339 = scalar_lea.hbm %s1, %s338
          %s341 = sshll.u32 %s333, 4
          %s342 = int_to_ptr.vmem [resolvable:$true] %s341
          %344 = dma.hbm_to_vmem [thread:$0]  %s339, 32, %s342, %s330
        $region48: #{tpu_custom_call.1} parent=39 // pred_fallthru
          _
      $region40: #{tpu_custom_call.1} parent=5 // pred_fallthru
        _
      %p345 = scmp.le.s32.totalorder 1, %s24
      %p346 = scmp.lt.s32.totalorder %s24, 3
      %p347 = pnand %p345, %p346
      %p348 = pneg %p347
      // Predicated region
      $region49: #{tpu_custom_call.1} parent=5 // pred_check
        _
      $region50: #{tpu_custom_call.1} parent=5 // pred_check_branch
        %350 = sbr.rel (%p347) target = $region52
      $region51: #{tpu_custom_call.1} parent=5 // pred_region
        %s351 = ssub.s32 %s24, 1
        %s352 = sand.u32 %s51, 1
        %s353 = scalar_lea.sflag [#allocation3], %s352
        %s354 = sand.u32 %s51, 1
        %s355 = smul.addr %s354, 16
        %s356 = scalar_lea.vmem [#allocation2], %s355
        // Predicated region
        $region53: #{tpu_custom_call.1} parent=51 // pred_check
          %p357 = pneg %p64
        $region54: #{tpu_custom_call.1} parent=51 // pred_check_branch
          %359 = sbr.rel (%p357) target = $region56
        $region55: #{tpu_custom_call.1} parent=51 // pred_region
          %360 = dma.done %s353, 256
        $region56: #{tpu_custom_call.1} parent=51 // pred_fallthru
          _
        %s361 = sand.u32 %s29, 1
        %s362 = scalar_lea.sflag [#allocation6], %s361
        %s363 = sand.u32 %s79, 1
        %s364 = smul.addr %s363, 2
        %s365 = scalar_lea.vmem [#allocation5], %s364
        // Predicated region
        $region57: #{tpu_custom_call.1} parent=51 // pred_check
          %p366 = pneg %p92
        $region58: #{tpu_custom_call.1} parent=51 // pred_check_branch
          %368 = sbr.rel (%p366) target = $region60
        $region59: #{tpu_custom_call.1} parent=51 // pred_region
          %369 = dma.done %s362, 32
        $region60: #{tpu_custom_call.1} parent=51 // pred_fallthru
          _
        // Predicated region
        $region61: #{tpu_custom_call.1} parent=51 // pred_check
          %p370 = pneg %p155
        $region62: #{tpu_custom_call.1} parent=51 // pred_check_branch
          %372 = sbr.rel (%p370) target = $region64
        $region63: #{tpu_custom_call.1} parent=51 // pred_region
          %373 = dma.done [#allocation6], 6144
        $region64: #{tpu_custom_call.1} parent=51 // pred_fallthru
          _
        // Predicated region
        $region65: #{tpu_custom_call.1} parent=51 // pred_check
          %p374 = pneg %p197
        $region66: #{tpu_custom_call.1} parent=51 // pred_check_branch
          %376 = sbr.rel (%p374) target = $region68
        $region67: #{tpu_custom_call.1} parent=51 // pred_region
          %377 = dma.done [#allocation9], 1024
        $region68: #{tpu_custom_call.1} parent=51 // pred_fallthru
          _
        %s378 = sand.u32 %s51, 1
        %s379 = scalar_lea.sflag [#allocation3], %s378
        %s380 = sand.u32 %s51, 1
        %s381 = smul.addr %s380, 16
        %s382 = scalar_lea.vmem [#allocation2], %s381
        %p383 = pneg %p64
        %p384 = pneg %p61
        %s385 = sand.u32 %s29, 1
        %s386 = scalar_lea.sflag [#allocation6], %s385
        %s387 = sand.u32 %s79, 1
        %s388 = smul.addr %s387, 2
        %s389 = scalar_lea.vmem [#allocation5], %s388
        %p390 = pneg %p92
        %p391 = pneg %p89
        %p392 = pneg %p113
        %p393 = pneg %p110
        %p394 = pneg %p134
        %p395 = pneg %p131
        %p396 = pneg %p155
        %p397 = pneg %p152
        %p398 = pneg %p176
        %p399 = pneg %p173
        %p400 = pneg %p197
        %p401 = pneg %p194
        %p402 = pneg %p218
        %p403 = pneg %p215
        %p404 = pneg %p246
        %p405 = pneg %p243
        %s406 = sand.u32 %s233, 1
        %s407 = scalar_lea.sflag [#allocation4], %s406
        %s408 = sand.u32 %s233, 1
        %s409 = smul.addr %s408, 16
        %s410 = scalar_lea.vmem [#allocation10], %s409
        %s411 = smul.u32 2, %s34
        %s412 = smul.u32 2, %s34
        %v414 = vld [vmem:[%s356] sm:$0xff]
        %v415 = vld [vmem:[%s356 + $0x8] sm:$0xff]
        %v416 = vld [vmem:[%s2] sm:$0x1]
        %v418 = vlaneseq
        %v419 = vshrl.u32 %v418, 7
        %v420 = vsub.s32 0, %v419
        %v421 = vrot.slane %v416, %v420
        %v423 = vmul.f32 %v414, %v421
        %v424 = vmul.f32 %v415, %v421
        %v425 = vld [vmem:[%s3] sm:$0x1]
        %v427 = vlaneseq
        %v428 = vshrl.u32 %v427, 7
        %v429 = vsub.s32 0, %v428
        %v430 = vrot.slane %v425, %v429
        %v432 = vadd.f32 %v423, %v430
        %v433 = vadd.f32 %v424, %v430
        %v434 = vld [vmem:[%s365] sm:$0x3]
        %vm437 = vcmask 1040384
        %v438 = vrot.slane %v432, 7
        %v439 = vrot.slane %v433, 7
        %v440 = vsel %vm437, %v438, %v439
        %v444 = vsel %vm437, %v434, %v438
        %v445 = vsel %vm437, %v439, %v434
        %vm448 = vcmask 1046528
        %v449 = vrot.slane %v444, 1
        %v450 = vrot.slane %v440, 1
        %v451 = vsel %vm448, %v449, %v450
        %v452 = vrot.slane %v445, 1
        %v453 = vsel %vm448, %v450, %v452
        %vm456 = vcmask 1045504
        %v457 = vrot.slane %v444, 2
        %v458 = vrot.slane %v440, 2
        %v459 = vsel %vm456, %v457, %v458
        %v460 = vrot.slane %v445, 2
        %v461 = vsel %vm456, %v458, %v460
        %v464 = vpack.c.bf16 %v440, %v444
        %v465 = vpack.c.bf16 %v453, %v451
        %v466 = vpack.c.bf16 %v461, %v459
        %v467 = vld [vmem:[#allocation7] sm:$0xff]
        %v468 = vld [vmem:[#allocation7 + $0x8] sm:$0xff]
        %v469 = vld [vmem:[#allocation7 + $0x10] sm:$0xff]
        %v470 = vld [vmem:[#allocation7 + $0x18] sm:$0xff]
        %v471 = vld [vmem:[#allocation7 + $0x20] sm:$0xff]
        %v472 = vld [vmem:[#allocation7 + $0x28] sm:$0xff]
        %v473 = vld [vmem:[#allocation7 + $0x30] sm:$0xff]
        %v474 = vld [vmem:[#allocation7 + $0x38] sm:$0xff]
        %v475 = vld [vmem:[#allocation7 + $0x40] sm:$0xff]
        %v476 = vld [vmem:[#allocation7 + $0x48] sm:$0xff]
        %v477 = vld [vmem:[#allocation7 + $0x50] sm:$0xff]
        %v478 = vld [vmem:[#allocation7 + $0x58] sm:$0xff]
        %v479 = vld [vmem:[#allocation7 + $0x60] sm:$0xff]
        %v480 = vld [vmem:[#allocation7 + $0x68] sm:$0xff]
        %v481 = vld [vmem:[#allocation7 + $0x70] sm:$0xff]
        %v482 = vld [vmem:[#allocation7 + $0x78] sm:$0xff]
        %v483 = vld [vmem:[#allocation7 + $0x80] sm:$0xff]
        %v484 = vld [vmem:[#allocation7 + $0x88] sm:$0xff]
        %v485 = vld [vmem:[#allocation7 + $0x90] sm:$0xff]
        %v486 = vld [vmem:[#allocation7 + $0x98] sm:$0xff]
        %v487 = vld [vmem:[#allocation7 + $0xa0] sm:$0xff]
        %v488 = vld [vmem:[#allocation7 + $0xa8] sm:$0xff]
        %v489 = vld [vmem:[#allocation7 + $0xb0] sm:$0xff]
        %v490 = vld [vmem:[#allocation7 + $0xb8] sm:$0xff]
        %v491 = vld [vmem:[#allocation7 + $0xc0] sm:$0xff]
        %v492 = vld [vmem:[#allocation7 + $0xc8] sm:$0xff]
        %v493 = vld [vmem:[#allocation7 + $0xd0] sm:$0xff]
        %v494 = vld [vmem:[#allocation7 + $0xd8] sm:$0xff]
        %v495 = vld [vmem:[#allocation7 + $0xe0] sm:$0xff]
        %v496 = vld [vmem:[#allocation7 + $0xe8] sm:$0xff]
        %v497 = vld [vmem:[#allocation7 + $0xf0] sm:$0xff]
        %v498 = vld [vmem:[#allocation7 + $0xf8] sm:$0xff]
        %v499 = vld [vmem:[#allocation7 + $0x100] sm:$0xff]
        %v500 = vld [vmem:[#allocation7 + $0x108] sm:$0xff]
        %v501 = vld [vmem:[#allocation7 + $0x110] sm:$0xff]
        %v502 = vld [vmem:[#allocation7 + $0x118] sm:$0xff]
        %v503 = vld [vmem:[#allocation7 + $0x120] sm:$0xff]
        %v504 = vld [vmem:[#allocation7 + $0x128] sm:$0xff]
        %v505 = vld [vmem:[#allocation7 + $0x130] sm:$0xff]
        %v506 = vld [vmem:[#allocation7 + $0x138] sm:$0xff]
        %v507 = vld [vmem:[#allocation7 + $0x140] sm:$0xff]
        %v508 = vld [vmem:[#allocation7 + $0x148] sm:$0xff]
        %v509 = vld [vmem:[#allocation7 + $0x150] sm:$0xff]
        %v510 = vld [vmem:[#allocation7 + $0x158] sm:$0xff]
        %v511 = vld [vmem:[#allocation7 + $0x160] sm:$0xff]
        %v512 = vld [vmem:[#allocation7 + $0x168] sm:$0xff]
        %v513 = vld [vmem:[#allocation7 + $0x170] sm:$0xff]
        %v514 = vld [vmem:[#allocation7 + $0x178] sm:$0xff]
        %v515 = vld [vmem:[%s5] sm:$0x3]
        %v517 = vlaneseq
        %v518 = vshrl.u32 %v517, 7
        %v519 = vsub.s32 0, %v518
        %v520 = vrot.slane %v515, %v519
        %v521 = vlaneseq
        %v522 = vshrl.u32 %v521, 7
        %v523 = vsub.s32 1, %v522
        %v524 = vrot.slane %v515, %v523
        %v575 = vunpack.c.l.b16 %v467
        %v576 = vunpack.c.h.b16 %v467
        %v577 = vunpack.c.l.b16 %v468
        %v578 = vunpack.c.h.b16 %v468
        %v579 = vunpack.c.l.b16 %v469
        %v580 = vunpack.c.h.b16 %v469
        %v581 = vunpack.c.l.b16 %v470
        %v582 = vunpack.c.h.b16 %v470
        %v583 = vunpack.c.l.b16 %v471
        %v584 = vunpack.c.h.b16 %v471
        %v585 = vunpack.c.l.b16 %v472
        %v586 = vunpack.c.h.b16 %v472
        %v587 = vunpack.c.l.b16 %v473
        %v588 = vunpack.c.h.b16 %v473
        %v589 = vunpack.c.l.b16 %v474
        %v590 = vunpack.c.h.b16 %v474
        %v591 = vunpack.c.l.b16 %v475
        %v592 = vunpack.c.h.b16 %v475
        %v593 = vunpack.c.l.b16 %v476
        %v594 = vunpack.c.h.b16 %v476
        %v595 = vunpack.c.l.b16 %v477
        %v596 = vunpack.c.h.b16 %v477
        %v597 = vunpack.c.l.b16 %v478
        %v598 = vunpack.c.h.b16 %v478
        %v599 = vunpack.c.l.b16 %v479
        %v600 = vunpack.c.h.b16 %v479
        %v601 = vunpack.c.l.b16 %v480
        %v602 = vunpack.c.h.b16 %v480
        %v603 = vunpack.c.l.b16 %v481
        %v604 = vunpack.c.h.b16 %v481
        %v605 = vunpack.c.l.b16 %v482
        %v606 = vunpack.c.h.b16 %v482
        %v607 = vunpack.c.l.b16 %v483
        %v608 = vunpack.c.h.b16 %v483
        %v609 = vunpack.c.l.b16 %v484
        %v610 = vunpack.c.h.b16 %v484
        %v611 = vunpack.c.l.b16 %v485
        %v612 = vunpack.c.h.b16 %v485
        %v613 = vunpack.c.l.b16 %v486
        %v614 = vunpack.c.h.b16 %v486
        %v615 = vunpack.c.l.b16 %v487
        %v616 = vunpack.c.h.b16 %v487
        %v617 = vunpack.c.l.b16 %v488
        %v618 = vunpack.c.h.b16 %v488
        %v619 = vunpack.c.l.b16 %v489
        %v620 = vunpack.c.h.b16 %v489
        %v621 = vunpack.c.l.b16 %v490
        %v622 = vunpack.c.h.b16 %v490
        %v623 = vunpack.c.l.b16 %v491
        %v624 = vunpack.c.h.b16 %v491
        %v625 = vunpack.c.l.b16 %v492
        %v626 = vunpack.c.h.b16 %v492
        %v627 = vunpack.c.l.b16 %v493
        %v628 = vunpack.c.h.b16 %v493
        %v629 = vunpack.c.l.b16 %v494
        %v630 = vunpack.c.h.b16 %v494
        %v631 = vunpack.c.l.b16 %v495
        %v632 = vunpack.c.h.b16 %v495
        %v633 = vunpack.c.l.b16 %v496
        %v634 = vunpack.c.h.b16 %v496
        %v635 = vunpack.c.l.b16 %v497
        %v636 = vunpack.c.h.b16 %v497
        %v637 = vunpack.c.l.b16 %v498
        %v638 = vunpack.c.h.b16 %v498
        %v639 = vunpack.c.l.b16 %v499
        %v640 = vunpack.c.h.b16 %v499
        %v641 = vunpack.c.l.b16 %v500
        %v642 = vunpack.c.h.b16 %v500
        %v643 = vunpack.c.l.b16 %v501
        %v644 = vunpack.c.h.b16 %v501
        %v645 = vunpack.c.l.b16 %v502
        %v646 = vunpack.c.h.b16 %v502
        %v647 = vunpack.c.l.b16 %v503
        %v648 = vunpack.c.h.b16 %v503
        %v649 = vunpack.c.l.b16 %v504
        %v650 = vunpack.c.h.b16 %v504
        %v651 = vunpack.c.l.b16 %v505
        %v652 = vunpack.c.h.b16 %v505
        %v653 = vunpack.c.l.b16 %v506
        %v654 = vunpack.c.h.b16 %v506
        %v655 = vunpack.c.l.b16 %v507
        %v656 = vunpack.c.h.b16 %v507
        %v657 = vunpack.c.l.b16 %v508
        %v658 = vunpack.c.h.b16 %v508
        %v659 = vunpack.c.l.b16 %v509
        %v660 = vunpack.c.h.b16 %v509
        %v661 = vunpack.c.l.b16 %v510
        %v662 = vunpack.c.h.b16 %v510
        %v663 = vunpack.c.l.b16 %v511
        %v664 = vunpack.c.h.b16 %v511
        %v665 = vunpack.c.l.b16 %v512
        %v666 = vunpack.c.h.b16 %v512
        %v667 = vunpack.c.l.b16 %v513
        %v668 = vunpack.c.h.b16 %v513
        %v669 = vunpack.c.l.b16 %v514
        %v670 = vunpack.c.h.b16 %v514
        %v671 = vpack.c.b16 %v577, %v575
        %v672 = vpack.c.b16 %v578, %v576
        %v673 = vpack.c.b16 %v581, %v579
        %v674 = vpack.c.b16 %v582, %v580
        %v675 = vpack.c.b16 %v585, %v583
        %v676 = vpack.c.b16 %v586, %v584
        %v677 = vpack.c.b16 %v589, %v587
        %v678 = vpack.c.b16 %v590, %v588
        %v679 = vpack.c.b16 %v593, %v591
        %v680 = vpack.c.b16 %v594, %v592
        %v681 = vpack.c.b16 %v597, %v595
        %v682 = vpack.c.b16 %v598, %v596
        %v683 = vpack.c.b16 %v601, %v599
        %v684 = vpack.c.b16 %v602, %v600
        %v685 = vpack.c.b16 %v605, %v603
        %v686 = vpack.c.b16 %v606, %v604
        %v687 = vpack.c.b16 %v609, %v607
        %v688 = vpack.c.b16 %v610, %v608
        %v689 = vpack.c.b16 %v613, %v611
        %v690 = vpack.c.b16 %v614, %v612
        %v691 = vpack.c.b16 %v617, %v615
        %v692 = vpack.c.b16 %v618, %v616
        %v693 = vpack.c.b16 %v621, %v619
        %v694 = vpack.c.b16 %v622, %v620
        %v695 = vpack.c.b16 %v625, %v623
        %v696 = vpack.c.b16 %v626, %v624
        %v697 = vpack.c.b16 %v629, %v627
        %v698 = vpack.c.b16 %v630, %v628
        %v699 = vpack.c.b16 %v633, %v631
        %v700 = vpack.c.b16 %v634, %v632
        %v701 = vpack.c.b16 %v637, %v635
        %v702 = vpack.c.b16 %v638, %v636
        %v703 = vpack.c.b16 %v641, %v639
        %v704 = vpack.c.b16 %v642, %v640
        %v705 = vpack.c.b16 %v645, %v643
        %v706 = vpack.c.b16 %v646, %v644
        %v707 = vpack.c.b16 %v649, %v647
        %v708 = vpack.c.b16 %v650, %v648
        %v709 = vpack.c.b16 %v653, %v651
        %v710 = vpack.c.b16 %v654, %v652
        %v711 = vpack.c.b16 %v657, %v655
        %v712 = vpack.c.b16 %v658, %v656
        %v713 = vpack.c.b16 %v661, %v659
        %v714 = vpack.c.b16 %v662, %v660
        %v715 = vpack.c.b16 %v665, %v663
        %v716 = vpack.c.b16 %v666, %v664
        %v717 = vpack.c.b16 %v669, %v667
        %v718 = vpack.c.b16 %v670, %v668
        %767 = vmatprep.subr.bf16.mxu0 %v672
        %768 = vmatpush1.bf16.msra.mxu0 %v671
        %769 = vmatprep.subr.bf16.mxu0 %v674
        %770 = vmatpush1.bf16.msra.mxu0 %v673
        %771 = vmatprep.subr.bf16.mxu0 %v676
        %772 = vmatpush1.bf16.msra.mxu0 %v675
        %773 = vmatprep.subr.bf16.mxu0 %v678
        %774 = vmatpush1.bf16.msra.mxu0 %v677
        %775 = vmatprep.subr.bf16.mxu0 %v680
        %776 = vmatpush1.bf16.msra.mxu0 %v679
        %777 = vmatprep.subr.bf16.mxu0 %v682
        %778 = vmatpush1.bf16.msra.mxu0 %v681
        %779 = vmatprep.subr.bf16.mxu0 %v684
        %780 = vmatpush1.bf16.msra.mxu0 %v683
        %781 = vmatprep.subr.bf16.mxu0 %v686
        %782 = vmatpush1.bf16.msra.mxu0 %v685
        %783 = vmatprep.subr.bf16.mxu0 %v688
        %784 = vmatpush1.bf16.msra.mxu0 %v687
        %785 = vmatprep.subr.bf16.mxu0 %v690
        %786 = vmatpush1.bf16.msra.mxu0 %v689
        %787 = vmatprep.subr.bf16.mxu0 %v692
        %788 = vmatpush1.bf16.msra.mxu0 %v691
        %789 = vmatprep.subr.bf16.mxu0 %v694
        %790 = vmatpush1.bf16.msra.mxu0 %v693
        %791 = vmatprep.subr.bf16.mxu0 %v696
        %792 = vmatpush1.bf16.msra.mxu0 %v695
        %793 = vmatprep.subr.bf16.mxu0 %v698
        %794 = vmatpush1.bf16.msra.mxu0 %v697
        %795 = vmatprep.subr.bf16.mxu0 %v700
        %796 = vmatpush1.bf16.msra.mxu0 %v699
        %797 = vmatprep.subr.bf16.mxu0 %v702
        %798 = vmatpush1.bf16.msra.mxu0 %v701
        %799 = vmatprep.mubr.bf16.mxu0 %v465
        %800 = vmatmul.mubr.bf16.gmra.mrb[0].mxu0 %v464
        %v801 = vpop.f32.mrb[0].mxu0
        %v802 = vadd.f32 %v520, %v801
        %v803 = vpop.f32.mrb[0].mxu0
        %v804 = vadd.f32 %v524, %v803
        %v805 = vpop.f32.mrb[0].mxu0
        %v806 = vadd.f32 %v520, %v805
        %v807 = vpop.f32.mrb[0].mxu0
        %v808 = vadd.f32 %v524, %v807
        %809 = vdwg.mxu0
        %810 = vmatprep.subr.bf16.mxu0 %v704
        %811 = vmatpush1.bf16.msra.mxu0 %v703
        %812 = vmatprep.subr.bf16.mxu0 %v706
        %813 = vmatpush1.bf16.msra.mxu0 %v705
        %814 = vmatprep.subr.bf16.mxu0 %v708
        %815 = vmatpush1.bf16.msra.mxu0 %v707
        %816 = vmatprep.subr.bf16.mxu0 %v710
        %817 = vmatpush1.bf16.msra.mxu0 %v709
        %818 = vmatprep.subr.bf16.mxu0 %v712
        %819 = vmatpush1.bf16.msra.mxu0 %v711
        %820 = vmatprep.subr.bf16.mxu0 %v714
        %821 = vmatpush1.bf16.msra.mxu0 %v713
        %822 = vmatprep.subr.bf16.mxu0 %v716
        %823 = vmatpush1.bf16.msra.mxu0 %v715
        %824 = vmatprep.subr.bf16.mxu0 %v718
        %825 = vmatpush1.bf16.msra.mxu0 %v717
        %826 = vmatprep.subr.bf16.mxu0 0
        %827 = vmatpush1.bf16.msra.mxu0 0
        %828 = vmatprep.subr.bf16.mxu0 0
        %829 = vmatpush1.bf16.msra.mxu0 0
        %830 = vmatprep.subr.bf16.mxu0 0
        %831 = vmatpush1.bf16.msra.mxu0 0
        %832 = vmatprep.subr.bf16.mxu0 0
        %833 = vmatpush1.bf16.msra.mxu0 0
        %834 = vmatprep.subr.bf16.mxu0 0
        %835 = vmatpush1.bf16.msra.mxu0 0
        %836 = vmatprep.subr.bf16.mxu0 0
        %837 = vmatpush1.bf16.msra.mxu0 0
        %838 = vmatprep.subr.bf16.mxu0 0
        %839 = vmatpush1.bf16.msra.mxu0 0
        %840 = vmatprep.subr.bf16.mxu0 0
        %841 = vmatpush1.bf16.msra.mxu0 0
        %842 = vmatprep.mubr.bf16.mxu0 0
        %843 = vmatmul.mubr.bf16.gmra.mrb[0].mxu0 %v466
        %v844 = vpop.f32.mrb[0].mxu0
        %v845 = vadd.f32 %v802, %v844
        %v846 = vpop.f32.mrb[0].mxu0
        %v847 = vadd.f32 %v804, %v846
        %v848 = vpop.f32.mrb[0].mxu0
        %v849 = vadd.f32 %v806, %v848
        %v850 = vpop.f32.mrb[0].mxu0
        %v851 = vadd.f32 %v808, %v850
        %852 = vdwg.mxu0
        %v853 = vsub.f32 0.0, %v847
        %v854 = vsub.f32 0.0, %v851
        %v855 = vmul.f32 %v853, 1.442695
        %v856 = vpow.pop %v855
        %v857 = vmul.f32 %v854, 1.442695
        %v858 = vpow.pop %v857
        %v859 = vadd.f32 %v856, 1.0
        %v860 = vadd.f32 %v858, 1.0
        %v861 = vrcp.pop %v859
        %v862 = vrcp.pop %v860
        %v863 = vmul.f32 %v845, %v861
        %v864 = vmul.f32 %v849, %v862
        %v865 = vpack.c.bf16 %v864, %v863
        %v866 = vld [vmem:[#allocation8] sm:$0xf]
        %v867 = vld [vmem:[#allocation8 + $0x4] sm:$0xf]
        %v868 = vld [vmem:[#allocation8 + $0x8] sm:$0xf]
        %v869 = vld [vmem:[#allocation8 + $0xc] sm:$0xf]
        %v870 = vld [vmem:[#allocation8 + $0x10] sm:$0xf]
        %v871 = vld [vmem:[#allocation8 + $0x14] sm:$0xf]
        %v872 = vld [vmem:[#allocation8 + $0x18] sm:$0xf]
        %v873 = vld [vmem:[#allocation8 + $0x1c] sm:$0xf]
        %v874 = vld [vmem:[#allocation8 + $0x20] sm:$0xf]
        %v875 = vld [vmem:[#allocation8 + $0x24] sm:$0xf]
        %v876 = vld [vmem:[#allocation8 + $0x28] sm:$0xf]
        %v877 = vld [vmem:[#allocation8 + $0x2c] sm:$0xf]
        %v878 = vld [vmem:[#allocation8 + $0x30] sm:$0xf]
        %v879 = vld [vmem:[#allocation8 + $0x34] sm:$0xf]
        %v880 = vld [vmem:[#allocation8 + $0x38] sm:$0xf]
        %v881 = vld [vmem:[#allocation8 + $0x3c] sm:$0xf]
        %v882 = vld [vmem:[%s7] sm:$0x1]
        %v884 = vlaneseq
        %v885 = vshrl.u32 %v884, 7
        %v886 = vsub.s32 0, %v885
        %v887 = vrot.slane %v882, %v886
        %v905 = vunpack.c.l.b16 %v866
        %v906 = vunpack.c.l.b16 %v867
        %v907 = vunpack.c.l.b16 %v868
        %v908 = vunpack.c.l.b16 %v869
        %v909 = vunpack.c.l.b16 %v870
        %v910 = vunpack.c.l.b16 %v871
        %v911 = vunpack.c.l.b16 %v872
        %v912 = vunpack.c.l.b16 %v873
        %v913 = vunpack.c.l.b16 %v874
        %v914 = vunpack.c.l.b16 %v875
        %v915 = vunpack.c.l.b16 %v876
        %v916 = vunpack.c.l.b16 %v877
        %v917 = vunpack.c.l.b16 %v878
        %v918 = vunpack.c.l.b16 %v879
        %v919 = vunpack.c.l.b16 %v880
        %v920 = vunpack.c.l.b16 %v881
        %v921 = vpack.c.b16 %v906, %v905
        %v922 = vpack.c.b16 %v908, %v907
        %v923 = vpack.c.b16 %v910, %v909
        %v924 = vpack.c.b16 %v912, %v911
        %v925 = vpack.c.b16 %v914, %v913
        %v926 = vpack.c.b16 %v916, %v915
        %v927 = vpack.c.b16 %v918, %v917
        %v928 = vpack.c.b16 %v920, %v919
        %937 = vmatprep.subr.bf16.mxu0 0
        %938 = vmatpush1.bf16.msra.mxu0 %v921
        %939 = vmatprep.subr.bf16.mxu0 0
        %940 = vmatpush1.bf16.msra.mxu0 %v922
        %941 = vmatprep.subr.bf16.mxu0 0
        %942 = vmatpush1.bf16.msra.mxu0 %v923
        %943 = vmatprep.subr.bf16.mxu0 0
        %944 = vmatpush1.bf16.msra.mxu0 %v924
        %945 = vmatprep.subr.bf16.mxu0 0
        %946 = vmatpush1.bf16.msra.mxu0 %v925
        %947 = vmatprep.subr.bf16.mxu0 0
        %948 = vmatpush1.bf16.msra.mxu0 %v926
        %949 = vmatprep.subr.bf16.mxu0 0
        %950 = vmatpush1.bf16.msra.mxu0 %v927
        %951 = vmatprep.subr.bf16.mxu0 0
        %952 = vmatpush1.bf16.msra.mxu0 %v928
        %953 = vmatprep.subr.bf16.mxu0 0
        %954 = vmatpush1.bf16.msra.mxu0 0
        %955 = vmatprep.subr.bf16.mxu0 0
        %956 = vmatpush1.bf16.msra.mxu0 0
        %957 = vmatprep.subr.bf16.mxu0 0
        %958 = vmatpush1.bf16.msra.mxu0 0
        %959 = vmatprep.subr.bf16.mxu0 0
        %960 = vmatpush1.bf16.msra.mxu0 0
        %961 = vmatprep.subr.bf16.mxu0 0
        %962 = vmatpush1.bf16.msra.mxu0 0
        %963 = vmatprep.subr.bf16.mxu0 0
        %964 = vmatpush1.bf16.msra.mxu0 0
        %965 = vmatprep.subr.bf16.mxu0 0
        %966 = vmatpush1.bf16.msra.mxu0 0
        %967 = vmatprep.subr.bf16.mxu0 0
        %968 = vmatpush1.bf16.msra.mxu0 0
        %969 = vmatprep.mubr.bf16.mxu0 0
        %970 = vmatmul.mubr.bf16.gmra.mrb[0].mxu0 %v865
        %v971 = vpop.f32.mrb[0].mxu0
        %v972 = vadd.f32 %v887, %v971
        %v973 = vpop.f32.mrb[0].mxu0
        %v974 = vpop.f32.mrb[0].mxu0
        %v975 = vadd.f32 %v887, %v974
        %v976 = vpop.f32.mrb[0].mxu0
        %977 = vdwg.mxu0
        %v978 = vadd.f32 %v414, %v972
        %v979 = vadd.f32 %v415, %v975
        %980 = vst [vmem:[%s410] sm:$0xff] %v978
        %981 = vst [vmem:[%s410 + $0x8] sm:$0xff] %v979
        %s982 = sand.u32 %s233, 1
        %s983 = scalar_lea.sflag [#allocation4], %s982
        %s984 = sand.u32 %s233, 1
        %s985 = smul.addr %s984, 16
        %s986 = scalar_lea.vmem [#allocation10], %s985
        // Predicated region
        $region69: #{tpu_custom_call.1} parent=51 // pred_check
          %p987 = pneg %p243
        $region70: #{tpu_custom_call.1} parent=51 // pred_check_branch
          %989 = sbr.rel (%p987) target = $region72
        $region71: #{tpu_custom_call.1} parent=51 // pred_region
          %s990 = smul.u32 2, %s34
          %s992 = ssub.s32 256, 256
          %993 = vsyncadd %s983, %s992
          %s994 = smul.addr %s33, 2
          %s995 = sadd.s32 %s990, %s994
          %s996 = smul.addr %s995, 128
          %s997 = scalar_lea.hbm %s8, %s996
          %s998 = sshll.u32 %s986, 4
          %s999 = int_to_ptr.vmem [resolvable:$true] %s998
          %1004 = dma.vmem_to_hbm [thread:$0]  %s999, 256, %s997, %s983, 128, 128, 8
        $region72: #{tpu_custom_call.1} parent=51 // pred_fallthru
          _
      $region52: #{tpu_custom_call.1} parent=5 // pred_fallthru
        _
      %p1005 = scmp.le.s32.totalorder 2, %s24
      // Predicated region
      $region73: #{tpu_custom_call.1} parent=5 // pred_check
        %p1006 = pneg %p1005
      $region74: #{tpu_custom_call.1} parent=5 // pred_check_branch
        %1008 = sbr.rel (%p1006) target = $region76
      $region75: #{tpu_custom_call.1} parent=5 // pred_region
        %s1009 = ssub.s32 %s24, 2
        // Predicated region
        $region77: #{tpu_custom_call.1} parent=75 // pred_check
          %p1010 = pneg %p249
        $region78: #{tpu_custom_call.1} parent=75 // pred_check_branch
          %1012 = sbr.rel (%p1010) target = $region80
        $region79: #{tpu_custom_call.1} parent=75 // pred_region
          %s1013 = sand.u32 %s234, 1
          %s1014 = scalar_lea.sflag [#allocation4], %s1013
          %s1015 = sand.u32 %s234, 1
          %s1016 = smul.addr %s1015, 16
          %s1017 = scalar_lea.vmem [#allocation10], %s1016
          %1018 = dma.done %s1014, 256
        $region80: #{tpu_custom_call.1} parent=75 // pred_fallthru
          _
      $region76: #{tpu_custom_call.1} parent=5 // pred_fallthru
        _
    $region6: #{tpu_custom_call.1} parent=1 // loop_footer
      %s28 = sadd.s32 1, %s24
    $region7: #{tpu_custom_call.1} parent=1 // loop_footer_branch
      %23 = sbr.rel target = $region3
    $region8: #{tpu_custom_call.1} parent=1 // loop_exit
      _
    %1019 = vsyncpa [#allocation3], 1
    %s1020 = scalar_lea.sflag [#allocation3], 1
    %1021 = vsyncpa %s1020, 1
    %1022 = vsyncpa [#allocation6], 1
    %s1023 = scalar_lea.sflag [#allocation6], 1
    %1024 = vsyncpa %s1023, 1
    %1025 = vsyncpa [#allocation9], 1
    %1026 = vsyncpa [#allocation4], 1
    %s1027 = scalar_lea.sflag [#allocation4], 1
    %1028 = vsyncpa %s1027, 1

</llo_original>
